<compile_context>
chip_gen: v7x
topology: tpu7x:2x2x1
jax: 0.10.0
libtpu: 0.0.40
codegen_flags: <defaults>
</compile_context>

<pallas_src>
import numpy as np
import jax
import jax.numpy as jnp
from jax import lax
from jax.experimental import pallas as pl
from jax.experimental.pallas import tpu as pltpu

LANE = 128  # one vreg lane group; each conv tap / the class dim is padded to this


# --------------------------------------------------------------------------
# Pallas kernel
# --------------------------------------------------------------------------
def make_cnn_classifier_kernel(kernel_sizes, num_filters):
  kernel_sizes = tuple(int(k) for k in kernel_sizes)
  F = int(num_filters)

  def kernel(x_ref, wcat_ref, bconv_ref, wfc_ref, bfc_ref, out_ref):
    # x_ref    : [TB, S, E]   bf16 embedded tokens (one batch tile)
    # wcat_ref : [E, D]       bf16, D = sum(k)*128; per-tap 128-lane blocks,
    #                         first F lanes of each block are real, rest 0
    # bconv_ref: [1, K*128]   f32 conv bias (pad lanes 0)
    # wfc_ref  : [K*128, 128] bf16 fc weight (pad rows / cols 0)
    # bfc_ref  : [1, 128]     f32 fc bias (pad lanes -1e9 -> softmax prob ~ 0)
    # out_ref  : [TB, 128]    f32 softmax probabilities (lane-dense, padded)
    TB, S, E = x_ref.shape
    N = TB * S
    f32 = jnp.float32

    # (1) ONE lane-dense MXU matmul covering every tap of every kernel size.
    #     (At real sizes choose TB so TB*S >= 256; with real E >= 128 the MXU
    #     contraction dim is also well utilized.)
    x2 = x_ref[...].reshape(N, E)                                   # bf16
    pre = jnp.dot(x2, wcat_ref[...], preferred_element_type=f32)    # [N, D] f32

    # (2) temporal tap alignment: lane-aligned tap views + XLU sublane rolls,
    #     one boundary mask, one cross-sublane max per kernel size.
    t_idx = lax.broadcasted_iota(jnp.int32, (TB, S, LANE), 1)       # time index
    pooled_parts = []
    off = 0
    for ks in kernel_sizes:
      T = S - ks + 1                          # valid conv output positions
      acc = pre[:, off:off + LANE]            # tap 0 (lane-aligned free view)
      for dk in range(1, ks):
        blk = pre[:, off + dk * LANE:off + (dk + 1) * LANE]         # [N, 128]
        # jnp.roll semantics: rolled[r] = blk[(r + dk) % N]; rows that wrap
        # (t >= S - dk >= T, incl. across batch-row boundaries) are masked.
        acc = acc + pltpu.roll(blk, shift=N - dk, axis=0)
      off += ks * LANE
      acc = acc.reshape(TB, S, LANE)
      acc = jnp.where(t_idx < T, acc, -1e30)        # mask invalid time rows
      pooled_parts.append(jnp.max(acc, axis=1))                     # [TB, 128]

    cat = jnp.concatenate(pooled_parts, axis=-1)                    # [TB, K*128]
    # conv bias is time-independent: relu(max_t y_t + b) == max_t relu(y_t + b)
    cat = jnp.maximum(cat + bconv_ref[...], 0.0)

    # (3) classifier head + numerically stable softmax (lane-dense store).
    logits = jnp.dot(cat.astype(jnp.bfloat16), wfc_ref[...],
                     preferred_element_type=f32) + bfc_ref[...]     # [TB, 128]
    m = jnp.max(logits, axis=-1, keepdims=True)
    e = jnp.exp(logits - m)                         # pad lanes -> exactly 0
    denom = jnp.sum(e, axis=-1, keepdims=True)
    out_ref[...] = e * pl.reciprocal(denom, approx=True)

  return kernel


# --------------------------------------------------------------------------
# Wrapper (embedding gather + weight re-layout in plain JAX)
# --------------------------------------------------------------------------
def cnn_classifier_forward(params, x_idx, *, batch_tile=None):
  emb_mat = params["embedding"]                       # [V, E]
  kernel_sizes = tuple(params["kernel_sizes"])
  F = int(params["num_filters"])
  K = len(kernel_sizes)
  B, S = x_idx.shape
  C = params["fc_w"].shape[0]
  E = emb_mat.shape[1]
  assert S >= max(kernel_sizes), "sequence shorter than largest conv kernel"

  # Batch tile: >= 8 sublanes; sized so the live [TB, S, D] f32 intermediate
  # plus double-buffered inputs stay well inside v7x's 64 MiB VMEM.
  TB = int(batch_tile) if batch_tile is not None else min(B, 64)
  TB = max(8, TB)
  Bp = pl.cdiv(B, TB) * TB

  # Embedding lookup (gather) — done outside the kernel at these sizes.
  # TODO(synk): at realistic vocab/batch, gather in-kernel (scalar-prefetched
  # token ids + per-row DMA from an HBM embedding ref) to avoid the extra HBM
  # round-trip of the embedded tensor.
  emb = jnp.take(emb_mat, x_idx, axis=0).astype(jnp.bfloat16)       # [B, S, E]
  if Bp != B:
    emb = jnp.pad(emb, ((0, Bp - B), (0, 0), (0, 0)))

  # Weight re-layout (layout plumbing, not compute): every conv tap gets its
  # own 128-lane block so in-kernel tap slices are lane-aligned free views.
  D = sum(kernel_sizes) * LANE
  KL = K * LANE
  CP = LANE
  blocks = []
  for (w, _) in params["convs"]:                      # PyTorch [F, 1, k, E]
    k = w.shape[2]
    for dk in range(k):
      blk = jnp.zeros((E, LANE), jnp.float32).at[:, :F].set(w[:, 0, dk, :].T)
      blocks.append(blk)
  wcat = jnp.concatenate(blocks, axis=1).astype(jnp.bfloat16)       # [E, D]

  bconv = jnp.zeros((1, KL), jnp.float32)
  wfc = jnp.zeros((KL, CP), jnp.float32)
  for i, (_, b) in enumerate(params["convs"]):
    bconv = bconv.at[0, i * LANE:i * LANE + F].set(b)
    wfc = wfc.at[i * LANE:i * LANE + F, :C].set(
        params["fc_w"][:, i * F:(i + 1) * F].T)
  wfc = wfc.astype(jnp.bfloat16)
  bfc = jnp.full((1, CP), -1e9, jnp.float32).at[0, :C].set(params["fc_b"])

  out = pl.pallas_call(
      make_cnn_classifier_kernel(kernel_sizes, F),
      out_shape=jax.ShapeDtypeStruct((Bp, CP), jnp.float32),
      grid=(Bp // TB,),
      in_specs=[
          pl.BlockSpec((TB, S, E), lambda i: (i, 0, 0)),   # emb: batch-tiled
          pl.BlockSpec((E, D), lambda i: (0, 0)),          # weights: broadcast
          pl.BlockSpec((1, KL), lambda i: (0, 0)),
          pl.BlockSpec((KL, CP), lambda i: (0, 0)),
          pl.BlockSpec((1, CP), lambda i: (0, 0)),
      ],
      out_specs=pl.BlockSpec((TB, CP), lambda i: (i, 0)),
      compiler_params=pltpu.CompilerParams(
          dimension_semantics=("parallel",),
          vmem_limit_bytes=48 * 1024 * 1024),
  )(emb, wcat, bconv, wfc, bfc)
  return out[:B, :C]


# --------------------------------------------------------------------------
# Deterministic synthetic parameters (shapes follow the nn.Module)
# --------------------------------------------------------------------------
def init_params(key, *, vocab_size, embedding_dim, num_filters, kernel_sizes,
                num_classes):
  keys = iter(jax.random.split(key, 32))

  def rnd(shape, scale=0.1):
    return scale * jax.random.normal(next(keys), shape, jnp.float32)

  params = {
      "embedding": jax.random.normal(next(keys), (vocab_size, embedding_dim),
                                     jnp.float32),
      "kernel_sizes": tuple(kernel_sizes),
      "num_filters": num_filters,
  }
  convs = []
  for k in kernel_sizes:
    w = rnd((num_filters, 1, k, embedding_dim))        # PyTorch Conv2d layout
    b = rnd((num_filters,))
    convs.append((w, b))
  params["convs"] = convs
  params["fc_w"] = rnd((num_classes, num_filters * len(kernel_sizes)))
  params["fc_b"] = rnd((num_classes,))
  return params


# --------------------------------------------------------------------------
# Pure-JAX reference (mirrors the PyTorch forward) for numerical checking
# --------------------------------------------------------------------------
def reference_forward(params, x_idx):
  emb = params["embedding"][x_idx]                                  # [B, S, E]
  B, S, E = emb.shape
  pooled = []
  for (w, b) in params["convs"]:
    k = w.shape[2]
    T = S - k + 1
    windows = jnp.stack([emb[:, dk:dk + T, :] for dk in range(k)], axis=2)
    conv = jnp.einsum("btke,fke->bft", windows, w[:, 0],
                      precision="highest") + b[None, :, None]
    conv = jax.nn.relu(conv)                                        # [B, F, T]
    pooled.append(jnp.max(conv, axis=2))                            # [B, F]
  cat = jnp.concatenate(pooled, axis=1)                             # [B, K*F]
  logits = jnp.dot(cat, params["fc_w"].T, precision="highest") + params["fc_b"]
  return jax.nn.softmax(logits, axis=-1)


# --------------------------------------------------------------------------
if __name__ == "__main__":
  B, S = 16, 16
  vocab_size, embedding_dim = 64, 32
  num_filters = 32
  kernel_sizes = (3, 4, 5)
  num_classes = 4

  key = jax.random.PRNGKey(0)
  kp, kx = jax.random.split(key, 2)
  params = init_params(kp, vocab_size=vocab_size, embedding_dim=embedding_dim,
                       num_filters=num_filters, kernel_sizes=kernel_sizes,
                       num_classes=num_classes)
  x_idx = jax.random.randint(kx, (B, S), 0, vocab_size, dtype=jnp.int32)

  # batch_tile=8 -> grid=(2,): exercises the batch-parallel grid + pipelining.
  out = cnn_classifier_forward(params, x_idx, batch_tile=8)
  jax.block_until_ready(out)

  assert out.shape == (B, num_classes)
  out_np = np.asarray(out)
  # softmax rows sum to ~1 (approx-reciprocal + bf16 matmuls -> loose tol)
  np.testing.assert_allclose(out_np.sum(axis=-1), np.ones((B,)), rtol=5e-3,
                             atol=5e-3)

  ref = np.asarray(reference_forward(params, x_idx))
  np.testing.assert_allclose(out_np, ref, rtol=5e-2, atol=2e-2)

  print("KERNEL_OK")
</pallas_src>

<mosaic_0001>
module attributes {stable_mosaic.version = 11 : i64} {
  func.func @kernel(%arg0: i32, %arg1: memref<8x16x32xbf16, #tpu.memory_space<vmem>>, %arg2: memref<32x1536xbf16, #tpu.memory_space<vmem>>, %arg3: memref<1x384xf32, #tpu.memory_space<vmem>>, %arg4: memref<384x128xbf16, #tpu.memory_space<vmem>>, %arg5: memref<1x128xf32, #tpu.memory_space<vmem>>, %arg6: memref<8x128xf32, #tpu.memory_space<vmem>>) attributes {dimension_semantics = [#tpu.dimension_semantics<parallel>], iteration_bounds = array<i64: 2>, scalar_prefetch = 0 : i64, scratch_operands = 0 : i64, tpu.core_type = #tpu.core_type<tc>, window_params = [{transform_indices = @transform_0, window_bounds = array<i64: 8, 16, 32>}, {pipeline_mode = #tpu.pipeline_mode<synchronous>, transform_indices = @transform_1, window_bounds = array<i64: 32, 1536>}, {pipeline_mode = #tpu.pipeline_mode<synchronous>, transform_indices = @transform_2, window_bounds = array<i64: 1, 384>}, {pipeline_mode = #tpu.pipeline_mode<synchronous>, transform_indices = @transform_3, window_bounds = array<i64: 384, 128>}, {pipeline_mode = #tpu.pipeline_mode<synchronous>, transform_indices = @transform_4, window_bounds = array<i64: 1, 128>}, {transform_indices = @transform_5, window_bounds = array<i64: 8, 128>}]} {
    %c0 = arith.constant 0 : index
    %c0_0 = arith.constant 0 : index
    %c0_1 = arith.constant 0 : index
    %0 = vector.load %arg1[%c0, %c0_0, %c0_1] : memref<8x16x32xbf16, #tpu.memory_space<vmem>>, vector<8x16x32xbf16>
    %1 = vector.shape_cast %0 : vector<8x16x32xbf16> to vector<128x32xbf16>
    %c0_2 = arith.constant 0 : index
    %c0_3 = arith.constant 0 : index
    %2 = vector.load %arg2[%c0_2, %c0_3] : memref<32x1536xbf16, #tpu.memory_space<vmem>>, vector<32x1536xbf16>
    %cst = arith.constant dense<0.000000e+00> : vector<128x1536xf32>
    %3 = tpu.matmul %1, %2, %cst {dimension_numbers = #tpu.dot_dimension_numbers<[1], [0], [0], [1], [0, 0, 1, 1], [], []>} : vector<128x32xbf16>, vector<32x1536xbf16>, vector<128x1536xf32> -> vector<128x1536xf32>
    %4 = tpu.iota {dimensions = array<i32: 1>} : vector<8x16x128xi32>
    %5 = vector.extract_strided_slice %3 {offsets = [0, 0], sizes = [128, 128], strides = [1, 1]} : vector<128x1536xf32> to vector<128x128xf32>
    %6 = vector.extract_strided_slice %3 {offsets = [0, 128], sizes = [128, 128], strides = [1, 1]} : vector<128x1536xf32> to vector<128x128xf32>
    %c127_i32 = arith.constant 127 : i32
    %7 = tpu.dynamic_rotate %6 by %c127_i32 dim 0 : vector<128x128xf32>, i32 -> vector<128x128xf32>
    %8 = arith.addf %5, %7 : vector<128x128xf32>
    %9 = vector.extract_strided_slice %3 {offsets = [0, 256], sizes = [128, 128], strides = [1, 1]} : vector<128x1536xf32> to vector<128x128xf32>
    %c126_i32 = arith.constant 126 : i32
    %10 = tpu.dynamic_rotate %9 by %c126_i32 dim 0 : vector<128x128xf32>, i32 -> vector<128x128xf32>
    %11 = arith.addf %8, %10 : vector<128x128xf32>
    %12 = vector.shape_cast %11 : vector<128x128xf32> to vector<8x16x128xf32>
    %c14_i32 = arith.constant 14 : i32
    %13 = vector.broadcast %c14_i32 : i32 to vector<8x16x128xi32>
    %14 = arith.cmpi slt, %4, %13 : vector<8x16x128xi32>
    %cst_4 = arith.constant -1.000000e+30 : f32
    %15 = vector.broadcast %cst_4 : f32 to vector<8x16x128xf32>
    %16 = arith.select %14, %12, %15 : vector<8x16x128xi1>, vector<8x16x128xf32>
    %cst_5 = arith.constant dense<0xFF800000> : vector<8x128xf32>
    %17 = vector.multi_reduction <maximumf>, %16, %cst_5 [1] : vector<8x16x128xf32> to vector<8x128xf32>
    %18 = vector.extract_strided_slice %3 {offsets = [0, 384], sizes = [128, 128], strides = [1, 1]} : vector<128x1536xf32> to vector<128x128xf32>
    %19 = vector.extract_strided_slice %3 {offsets = [0, 512], sizes = [128, 128], strides = [1, 1]} : vector<128x1536xf32> to vector<128x128xf32>
    %c127_i32_6 = arith.constant 127 : i32
    %20 = tpu.dynamic_rotate %19 by %c127_i32_6 dim 0 : vector<128x128xf32>, i32 -> vector<128x128xf32>
    %21 = arith.addf %18, %20 : vector<128x128xf32>
    %22 = vector.extract_strided_slice %3 {offsets = [0, 640], sizes = [128, 128], strides = [1, 1]} : vector<128x1536xf32> to vector<128x128xf32>
    %c126_i32_7 = arith.constant 126 : i32
    %23 = tpu.dynamic_rotate %22 by %c126_i32_7 dim 0 : vector<128x128xf32>, i32 -> vector<128x128xf32>
    %24 = arith.addf %21, %23 : vector<128x128xf32>
    %25 = vector.extract_strided_slice %3 {offsets = [0, 768], sizes = [128, 128], strides = [1, 1]} : vector<128x1536xf32> to vector<128x128xf32>
    %c125_i32 = arith.constant 125 : i32
    %26 = tpu.dynamic_rotate %25 by %c125_i32 dim 0 : vector<128x128xf32>, i32 -> vector<128x128xf32>
    %27 = arith.addf %24, %26 : vector<128x128xf32>
    %28 = vector.shape_cast %27 : vector<128x128xf32> to vector<8x16x128xf32>
    %c13_i32 = arith.constant 13 : i32
    %29 = vector.broadcast %c13_i32 : i32 to vector<8x16x128xi32>
    %30 = arith.cmpi slt, %4, %29 : vector<8x16x128xi32>
    %cst_8 = arith.constant -1.000000e+30 : f32
    %31 = vector.broadcast %cst_8 : f32 to vector<8x16x128xf32>
    %32 = arith.select %30, %28, %31 : vector<8x16x128xi1>, vector<8x16x128xf32>
    %cst_9 = arith.constant dense<0xFF800000> : vector<8x128xf32>
    %33 = vector.multi_reduction <maximumf>, %32, %cst_9 [1] : vector<8x16x128xf32> to vector<8x128xf32>
    %34 = vector.extract_strided_slice %3 {offsets = [0, 896], sizes = [128, 128], strides = [1, 1]} : vector<128x1536xf32> to vector<128x128xf32>
    %35 = vector.extract_strided_slice %3 {offsets = [0, 1024], sizes = [128, 128], strides = [1, 1]} : vector<128x1536xf32> to vector<128x128xf32>
    %c127_i32_10 = arith.constant 127 : i32
    %36 = tpu.dynamic_rotate %35 by %c127_i32_10 dim 0 : vector<128x128xf32>, i32 -> vector<128x128xf32>
    %37 = arith.addf %34, %36 : vector<128x128xf32>
    %38 = vector.extract_strided_slice %3 {offsets = [0, 1152], sizes = [128, 128], strides = [1, 1]} : vector<128x1536xf32> to vector<128x128xf32>
    %c126_i32_11 = arith.constant 126 : i32
    %39 = tpu.dynamic_rotate %38 by %c126_i32_11 dim 0 : vector<128x128xf32>, i32 -> vector<128x128xf32>
    %40 = arith.addf %37, %39 : vector<128x128xf32>
    %41 = vector.extract_strided_slice %3 {offsets = [0, 1280], sizes = [128, 128], strides = [1, 1]} : vector<128x1536xf32> to vector<128x128xf32>
    %c125_i32_12 = arith.constant 125 : i32
    %42 = tpu.dynamic_rotate %41 by %c125_i32_12 dim 0 : vector<128x128xf32>, i32 -> vector<128x128xf32>
    %43 = arith.addf %40, %42 : vector<128x128xf32>
    %44 = vector.extract_strided_slice %3 {offsets = [0, 1408], sizes = [128, 128], strides = [1, 1]} : vector<128x1536xf32> to vector<128x128xf32>
    %c124_i32 = arith.constant 124 : i32
    %45 = tpu.dynamic_rotate %44 by %c124_i32 dim 0 : vector<128x128xf32>, i32 -> vector<128x128xf32>
    %46 = arith.addf %43, %45 : vector<128x128xf32>
    %47 = vector.shape_cast %46 : vector<128x128xf32> to vector<8x16x128xf32>
    %c12_i32 = arith.constant 12 : i32
    %48 = vector.broadcast %c12_i32 : i32 to vector<8x16x128xi32>
    %49 = arith.cmpi slt, %4, %48 : vector<8x16x128xi32>
    %cst_13 = arith.constant -1.000000e+30 : f32
    %50 = vector.broadcast %cst_13 : f32 to vector<8x16x128xf32>
    %51 = arith.select %49, %47, %50 : vector<8x16x128xi1>, vector<8x16x128xf32>
    %cst_14 = arith.constant dense<0xFF800000> : vector<8x128xf32>
    %52 = vector.multi_reduction <maximumf>, %51, %cst_14 [1] : vector<8x16x128xf32> to vector<8x128xf32>
    %53 = tpu.concatenate %17, %33, %52 in 1 : vector<8x128xf32>, vector<8x128xf32>, vector<8x128xf32> -> vector<8x384xf32>
    %c0_15 = arith.constant 0 : index
    %c0_16 = arith.constant 0 : index
    %54 = vector.load %arg3[%c0_15, %c0_16] : memref<1x384xf32, #tpu.memory_space<vmem>>, vector<1x384xf32>
    %55 = vector.broadcast %54 : vector<1x384xf32> to vector<8x384xf32>
    %56 = arith.addf %53, %55 : vector<8x384xf32>
    %cst_17 = arith.constant 0.000000e+00 : f32
    %57 = vector.broadcast %cst_17 : f32 to vector<8x384xf32>
    %58 = arith.maximumf %56, %57 : vector<8x384xf32>
    %59 = arith.truncf %58 : vector<8x384xf32> to vector<8x384xbf16>
    %c0_18 = arith.constant 0 : index
    %c0_19 = arith.constant 0 : index
    %60 = vector.load %arg4[%c0_18, %c0_19] : memref<384x128xbf16, #tpu.memory_space<vmem>>, vector<384x128xbf16>
    %cst_20 = arith.constant dense<0.000000e+00> : vector<8x128xf32>
    %61 = tpu.matmul %59, %60, %cst_20 {dimension_numbers = #tpu.dot_dimension_numbers<[1], [0], [0], [1], [0, 0, 1, 1], [], []>} : vector<8x384xbf16>, vector<384x128xbf16>, vector<8x128xf32> -> vector<8x128xf32>
    %c0_21 = arith.constant 0 : index
    %c0_22 = arith.constant 0 : index
    %62 = vector.load %arg5[%c0_21, %c0_22] : memref<1x128xf32, #tpu.memory_space<vmem>>, vector<1x128xf32>
    %63 = vector.broadcast %62 : vector<1x128xf32> to vector<8x128xf32>
    %64 = arith.addf %61, %63 : vector<8x128xf32>
    %cst_23 = arith.constant dense<0xFF800000> : vector<8xf32>
    %65 = vector.multi_reduction <maximumf>, %64, %cst_23 [1] : vector<8x128xf32> to vector<8xf32>
    %66 = vector.shape_cast %65 : vector<8xf32> to vector<8x1xf32>
    %67 = vector.broadcast %66 : vector<8x1xf32> to vector<8x128xf32>
    %68 = arith.subf %64, %67 : vector<8x128xf32>
    %69 = math.exp %68 : vector<8x128xf32>
    %cst_24 = arith.constant dense<0.000000e+00> : vector<8xf32>
    %70 = vector.multi_reduction <add>, %69, %cst_24 [1] : vector<8x128xf32> to vector<8xf32>
    %71 = vector.shape_cast %70 : vector<8xf32> to vector<8x1xf32>
    %72 = tpu.reciprocal %71 {approx = true} : vector<8x1xf32> -> vector<8x1xf32>
    %73 = vector.broadcast %72 : vector<8x1xf32> to vector<8x128xf32>
    %74 = arith.mulf %69, %73 : vector<8x128xf32>
    %c0_25 = arith.constant 0 : index
    %c0_26 = arith.constant 0 : index
    %75 = vector.load %arg6[%c0_25, %c0_26] : memref<8x128xf32, #tpu.memory_space<vmem>>, vector<8x128xf32>
    tpu.vector_store %arg6[%c0_25, %c0_26], %74 {strides = array<i32>} : memref<8x128xf32, #tpu.memory_space<vmem>>, vector<8x128xf32>,
    return
  }
  func.func @transform_0(%arg0: i32) -> (i32, i32, i32) {
    %c0_i32 = arith.constant 0 : i32
    %c0_i32_0 = arith.constant 0 : i32
    %c0_i32_1 = arith.constant 0 : i32
    return %arg0, %c0_i32, %c0_i32_0 : i32, i32, i32
  }
  func.func @transform_1(%arg0: i32) -> (i32, i32) {
    %c0_i32 = arith.constant 0 : i32
    %c0_i32_0 = arith.constant 0 : i32
    %c0_i32_1 = arith.constant 0 : i32
    return %c0_i32, %c0_i32_0 : i32, i32
  }
  func.func @transform_2(%arg0: i32) -> (i32, i32) {
    %c0_i32 = arith.constant 0 : i32
    %c0_i32_0 = arith.constant 0 : i32
    %c0_i32_1 = arith.constant 0 : i32
    return %c0_i32, %c0_i32_0 : i32, i32
  }
  func.func @transform_3(%arg0: i32) -> (i32, i32) {
    %c0_i32 = arith.constant 0 : i32
    %c0_i32_0 = arith.constant 0 : i32
    %c0_i32_1 = arith.constant 0 : i32
    return %c0_i32, %c0_i32_0 : i32, i32
  }
  func.func @transform_4(%arg0: i32) -> (i32, i32) {
    %c0_i32 = arith.constant 0 : i32
    %c0_i32_0 = arith.constant 0 : i32
    %c0_i32_1 = arith.constant 0 : i32
    return %c0_i32, %c0_i32_0 : i32, i32
  }
  func.func @transform_5(%arg0: i32) -> (i32, i32) {
    %c0_i32 = arith.constant 0 : i32
    %c0_i32_0 = arith.constant 0 : i32
    return %arg0, %c0_i32 : i32, i32
  }
}

</mosaic_0001>

<llo_original>
// kernel: tpu_custom_call.1
$region0: #{tpu_custom_call.1}
  #allocation0 [shape = 'u32[]', space=smem, size = 0x4, offset = 0x4, fixed_abs, tag = 'smem constant byte address 0x4 - core index']
  #allocation1 [shape = 'u32[144,128]{1,0:T(1,128)}', space=vmem, size = 0x12000, scoped, tag = 'internal scratch']
  %s0 = inlined_call_operand.hbm [shape: bf16[16,16,32], index: 0, kind: input, shape index: {}]
  %s1 = inlined_call_operand.hbm [shape: bf16[32,1536], index: 1, kind: input, shape index: {}]
  %s2 = inlined_call_operand.vmem [shape: f32[1,384], index: 2, kind: input, shape index: {}]
  %s3 = inlined_call_operand.hbm [shape: bf16[384,128], index: 3, kind: input, shape index: {}]
  %s4 = inlined_call_operand.vmem [shape: f32[1,128], index: 4, kind: input, shape index: {}]
  %s5 = inlined_call_operand.hbm [shape: f32[16,128], index: 5, kind: output, shape index: {}]
  %s6 = sld [smem:[#allocation0]]
  $region65: #{tpu_custom_call.1} parent=0
    _
  %s8 = ssub.s32 1, %s6
  %s9 = scalar_select 0, %s8, %s6
  $region1: #{tpu_custom_call.1} parent=0
    #allocation2 [shape = 'u8[65536]{0}', space=vmem, size = 0x10000, scoped, tag = 'input window, operand 0']
    #allocation3 [shape = 's32[2]{0}', space=sflag, size = 0x8, scoped, tag = 'scoped memory for tpu_custom_call.1']
    #allocation4 [shape = 's32[2]{0}', space=sflag, size = 0x8, scoped, tag = 'scoped memory for tpu_custom_call.1']
    #allocation5 [shape = 'u8[98304]{0}', space=vmem, size = 0x18000, scoped, tag = 'input window, operand 1, single buffered']
    #allocation6 [shape = 's32[1]{0}', space=sflag, size = 0x4, scoped, tag = 'scoped memory for tpu_custom_call.1']
    #allocation7 [shape = 'u8[98304]{0}', space=vmem, size = 0x18000, scoped, tag = 'input window, operand 3, single buffered']
    #allocation8 [shape = 'u8[8192]{0}', space=vmem, size = 0x2000, scoped, tag = 'output window, operand 0']
    %10 = vsyncpa [#allocation3], 0
    %s11 = scalar_lea.sflag [#allocation3], 1
    %12 = vsyncpa %s11, 0
    %13 = vsyncpa [#allocation6], 0
    %14 = vsyncpa [#allocation4], 0
    %s15 = scalar_lea.sflag [#allocation4], 1
    %16 = vsyncpa %s15, 0
    loop: start=0, step=1, limit=4
    $region2: #{tpu_custom_call.1} parent=1 // loop_pre_header
      _
    $region3: #{tpu_custom_call.1} parent=1 // loop_header
      %s18 = sphi 0, %s22
      %p19 = scmp.ge.s32.totalorder %s18, 4
      %s28 = sphi 0, %s30
      %s31 = sphi 0, %s28
      %s32 = sphi 0, %s31
      %s48 = sphi 0, %s32
      %s52 = sphi 0, %s52
      %s54 = sphi 0, %s52
      %s55 = sphi 0, %s54
      %s69 = sphi 0, %s55
      %s73 = sphi 0, %s73
      %s75 = sphi 0, %s73
      %s76 = sphi 0, %s75
      %s90 = sphi 0, %s76
      %s94 = sphi 0, %s94
      %s96 = sphi 0, %s94
      %s97 = sphi 0, %s96
      %s111 = sphi 0, %s97
      %s115 = sphi 0, %s115
      %s117 = sphi 0, %s115
      %s118 = sphi 0, %s117
      %s132 = sphi 0, %s118
      %s138 = sphi 0, %s140
      %s141 = sphi 0, %s138
      %s142 = sphi 0, %s141
      %s158 = sphi 0, %s142
    $region4: #{tpu_custom_call.1} parent=1 // loop_header_branch
      %21 = sbr.rel (%p19) target = $region8
    $region5: #{tpu_custom_call.1} parent=1 // loop_body
      %s23 = ssub.s32 %s18, 1
      %s24 = ssub.s32 %s18, 2
      %s25 = sadd.s32 %s18, 1
      %s26 = ssub.s32 %s18, %s25
      %p27 = scmp.eq.s32.totalorder %s26, 0
      %s29 = sadd.s32 %s28, 1
      %s30 = scalar_select %p27, %s28, %s29
      %p33 = pneg %p27
      %p34 = scmp.eq.s32.totalorder %s18, 1
      %p35 = por %p33, %p34
      %p36 = scmp.ne.s32.totalorder %s28, %s31
      %p37 = scmp.eq.s32.totalorder %s18, 0
      %p38 = por %p36, %p37
      %p39 = scmp.ne.s32.totalorder %s28, %s31
      %p40 = scmp.eq.s32.totalorder %s23, 1
      %p41 = por %p39, %p40
      %p42 = scmp.ne.s32.totalorder %s31, %s32
      %p43 = scmp.eq.s32.totalorder %s23, 0
      %p44 = por %p42, %p43
      %p45 = scmp.ne.s32.totalorder %s31, %s32
      %p46 = scmp.eq.s32.totalorder %s24, 1
      %p47 = por %p45, %p46
      %p49 = scmp.ne.s32.totalorder %s32, %s48
      %p50 = scmp.eq.s32.totalorder %s24, 0
      %p51 = por %p49, %p50
      %s53 = sadd.s32 %s52, 1
      %p56 = scmp.eq.s32.totalorder %s18, 1
      %p57 = scmp.ne.s32.totalorder %s52, %s54
      %p58 = scmp.eq.s32.totalorder %s18, 0
      %p59 = por %p57, %p58
      %p60 = scmp.ne.s32.totalorder %s52, %s54
      %p61 = scmp.eq.s32.totalorder %s23, 1
      %p62 = por %p60, %p61
      %p63 = scmp.ne.s32.totalorder %s54, %s55
      %p64 = scmp.eq.s32.totalorder %s23, 0
      %p65 = por %p63, %p64
      %p66 = scmp.ne.s32.totalorder %s54, %s55
      %p67 = scmp.eq.s32.totalorder %s24, 1
      %p68 = por %p66, %p67
      %p70 = scmp.ne.s32.totalorder %s55, %s69
      %p71 = scmp.eq.s32.totalorder %s24, 0
      %p72 = por %p70, %p71
      %s74 = sadd.s32 %s73, 1
      %p77 = scmp.eq.s32.totalorder %s18, 1
      %p78 = scmp.ne.s32.totalorder %s73, %s75
      %p79 = scmp.eq.s32.totalorder %s18, 0
      %p80 = por %p78, %p79
      %p81 = scmp.ne.s32.totalorder %s73, %s75
      %p82 = scmp.eq.s32.totalorder %s23, 1
      %p83 = por %p81, %p82
      %p84 = scmp.ne.s32.totalorder %s75, %s76
      %p85 = scmp.eq.s32.totalorder %s23, 0
      %p86 = por %p84, %p85
      %p87 = scmp.ne.s32.totalorder %s75, %s76
      %p88 = scmp.eq.s32.totalorder %s24, 1
      %p89 = por %p87, %p88
      %p91 = scmp.ne.s32.totalorder %s76, %s90
      %p92 = scmp.eq.s32.totalorder %s24, 0
      %p93 = por %p91, %p92
      %s95 = sadd.s32 %s94, 1
      %p98 = scmp.eq.s32.totalorder %s18, 1
      %p99 = scmp.ne.s32.totalorder %s94, %s96
      %p100 = scmp.eq.s32.totalorder %s18, 0
      %p101 = por %p99, %p100
      %p102 = scmp.ne.s32.totalorder %s94, %s96
      %p103 = scmp.eq.s32.totalorder %s23, 1
      %p104 = por %p102, %p103
      %p105 = scmp.ne.s32.totalorder %s96, %s97
      %p106 = scmp.eq.s32.totalorder %s23, 0
      %p107 = por %p105, %p106
      %p108 = scmp.ne.s32.totalorder %s96, %s97
      %p109 = scmp.eq.s32.totalorder %s24, 1
      %p110 = por %p108, %p109
      %p112 = scmp.ne.s32.totalorder %s97, %s111
      %p113 = scmp.eq.s32.totalorder %s24, 0
      %p114 = por %p112, %p113
      %s116 = sadd.s32 %s115, 1
      %p119 = scmp.eq.s32.totalorder %s18, 1
      %p120 = scmp.ne.s32.totalorder %s115, %s117
      %p121 = scmp.eq.s32.totalorder %s18, 0
      %p122 = por %p120, %p121
      %p123 = scmp.ne.s32.totalorder %s115, %s117
      %p124 = scmp.eq.s32.totalorder %s23, 1
      %p125 = por %p123, %p124
      %p126 = scmp.ne.s32.totalorder %s117, %s118
      %p127 = scmp.eq.s32.totalorder %s23, 0
      %p128 = por %p126, %p127
      %p129 = scmp.ne.s32.totalorder %s117, %s118
      %p130 = scmp.eq.s32.totalorder %s24, 1
      %p131 = por %p129, %p130
      %p133 = scmp.ne.s32.totalorder %s118, %s132
      %p134 = scmp.eq.s32.totalorder %s24, 0
      %p135 = por %p133, %p134
      %s136 = ssub.s32 %s18, %s25
      %p137 = scmp.eq.s32.totalorder %s136, 0
      %s139 = sadd.s32 %s138, 1
      %s140 = scalar_select %p137, %s138, %s139
      %p143 = pneg %p137
      %p144 = scmp.eq.s32.totalorder %s18, 1
      %p145 = por %p143, %p144
      %p146 = scmp.ne.s32.totalorder %s138, %s141
      %p147 = scmp.eq.s32.totalorder %s18, 0
      %p148 = por %p146, %p147
      %p149 = scmp.ne.s32.totalorder %s138, %s141
      %p150 = scmp.eq.s32.totalorder %s23, 1
      %p151 = por %p149, %p150
      %p152 = scmp.ne.s32.totalorder %s141, %s142
      %p153 = scmp.eq.s32.totalorder %s23, 0
      %p154 = por %p152, %p153
      %p155 = scmp.ne.s32.totalorder %s141, %s142
      %p156 = scmp.eq.s32.totalorder %s24, 1
      %p157 = por %p155, %p156
      %p159 = scmp.ne.s32.totalorder %s142, %s158
      %p160 = scmp.eq.s32.totalorder %s24, 0
      %p161 = por %p159, %p160
      %p162 = scmp.le.s32.totalorder 1, %s18
      %p163 = scmp.lt.s32.totalorder %s18, 3
      %p164 = pnand %p162, %p163
      %p165 = pneg %p164
      // Predicated region
      $region9: #{tpu_custom_call.1} parent=5 // pred_check
        _
      $region10: #{tpu_custom_call.1} parent=5 // pred_check_branch
        %167 = sbr.rel (%p164) target = $region12
      $region11: #{tpu_custom_call.1} parent=5 // pred_region
        %s168 = ssub.s32 %s18, 1
        // Predicated region
        $region13: #{tpu_custom_call.1} parent=11 // pred_check
          %p169 = pneg %p65
        $region14: #{tpu_custom_call.1} parent=11 // pred_check_branch
          %171 = sbr.rel (%p169) target = $region16
        $region15: #{tpu_custom_call.1} parent=11 // pred_region
          %s173 = ssub.s32 3072, 3072
          %174 = vsyncadd [#allocation6], %s173
          %s175 = sshll.u32 [#allocation5], 4
          %s176 = int_to_ptr.vmem [resolvable:$true] %s175
          %181 = dma.hbm_to_vmem [thread:$0]  %s1, 3072, %s176, [#allocation6], 768, 768, 48
        $region16: #{tpu_custom_call.1} parent=11 // pred_fallthru
          _
        // Predicated region
        $region17: #{tpu_custom_call.1} parent=11 // pred_check
          %p182 = pneg %p86
        $region18: #{tpu_custom_call.1} parent=11 // pred_check_branch
          %184 = sbr.rel (%p182) target = $region20
        $region19: #{tpu_custom_call.1} parent=11 // pred_region
          _
        $region20: #{tpu_custom_call.1} parent=11 // pred_fallthru
          _
        // Predicated region
        $region21: #{tpu_custom_call.1} parent=11 // pred_check
          %p185 = pneg %p107
        $region22: #{tpu_custom_call.1} parent=11 // pred_check_branch
          %187 = sbr.rel (%p185) target = $region24
        $region23: #{tpu_custom_call.1} parent=11 // pred_region
          %s189 = ssub.s32 3072, 3072
          %190 = vsyncadd [#allocation6], %s189
          %s191 = sshll.u32 [#allocation7], 4
          %s192 = int_to_ptr.vmem [resolvable:$true] %s191
          %197 = dma.hbm_to_vmem [thread:$0]  %s3, 3072, %s192, [#allocation6], 64, 64, 4
        $region24: #{tpu_custom_call.1} parent=11 // pred_fallthru
          _
        // Predicated region
        $region25: #{tpu_custom_call.1} parent=11 // pred_check
          %p198 = pneg %p128
        $region26: #{tpu_custom_call.1} parent=11 // pred_check_branch
          %200 = sbr.rel (%p198) target = $region28
        $region27: #{tpu_custom_call.1} parent=11 // pred_region
          _
        $region28: #{tpu_custom_call.1} parent=11 // pred_fallthru
          _
      $region12: #{tpu_custom_call.1} parent=5 // pred_fallthru
        _
      %p201 = scmp.lt.s32.totalorder %s18, 2
      // Predicated region
      $region29: #{tpu_custom_call.1} parent=5 // pred_check
        %p202 = pneg %p201
      $region30: #{tpu_custom_call.1} parent=5 // pred_check_branch
        %204 = sbr.rel (%p202) target = $region32
      $region31: #{tpu_custom_call.1} parent=5 // pred_region
        // Predicated region
        $region33: #{tpu_custom_call.1} parent=31 // pred_check
          %p205 = pneg %p38
        $region34: #{tpu_custom_call.1} parent=31 // pred_check_branch
          %207 = sbr.rel (%p205) target = $region36
        $region35: #{tpu_custom_call.1} parent=31 // pred_region
          %s208 = sand.u32 %s28, 1
          %s209 = scalar_lea.sflag [#allocation3], %s208
          %s210 = sand.u32 %s28, 1
          %s211 = smul.addr %s210, 64
          %s212 = scalar_lea.vmem [#allocation2], %s211
          %s213 = smul.u32 8, %s18
          %s215 = ssub.s32 1024, 1024
          %216 = vsyncadd %s209, %s215
          %s217 = smul.addr %s213, 2
          %s218 = smul.addr %s217, 64
          %s219 = scalar_lea.hbm %s0, %s218
          %s220 = sshll.u32 %s212, 4
          %s221 = int_to_ptr.vmem [resolvable:$true] %s220
          %226 = dma.hbm_to_vmem [thread:$0]  %s219, 1024, %s221, %s209, 64, 64, 4
        $region36: #{tpu_custom_call.1} parent=31 // pred_fallthru
          _
      $region32: #{tpu_custom_call.1} parent=5 // pred_fallthru
        _
      %p227 = scmp.le.s32.totalorder 1, %s18
      %p228 = scmp.lt.s32.totalorder %s18, 3
      %p229 = pnand %p227, %p228
      %p230 = pneg %p229
      // Predicated region
      $region37: #{tpu_custom_call.1} parent=5 // pred_check
        _
      $region38: #{tpu_custom_call.1} parent=5 // pred_check_branch
        %232 = sbr.rel (%p229) target = $region40
      $region39: #{tpu_custom_call.1} parent=5 // pred_region
        %s233 = ssub.s32 %s18, 1
        %s234 = sand.u32 %s31, 1
        %s235 = scalar_lea.sflag [#allocation3], %s234
        %s236 = sand.u32 %s31, 1
        %s237 = smul.addr %s236, 64
        %s238 = scalar_lea.vmem [#allocation2], %s237
        // Predicated region
        $region41: #{tpu_custom_call.1} parent=39 // pred_check
          %p239 = pneg %p44
        $region42: #{tpu_custom_call.1} parent=39 // pred_check_branch
          %241 = sbr.rel (%p239) target = $region44
        $region43: #{tpu_custom_call.1} parent=39 // pred_region
          %242 = dma.done %s235, 1024
        $region44: #{tpu_custom_call.1} parent=39 // pred_fallthru
          _
        // Predicated region
        $region45: #{tpu_custom_call.1} parent=39 // pred_check
          %p243 = pneg %p65
        $region46: #{tpu_custom_call.1} parent=39 // pred_check_branch
          %245 = sbr.rel (%p243) target = $region48
        $region47: #{tpu_custom_call.1} parent=39 // pred_region
          %246 = dma.done [#allocation6], 3072
        $region48: #{tpu_custom_call.1} parent=39 // pred_fallthru
          _
        // Predicated region
        $region49: #{tpu_custom_call.1} parent=39 // pred_check
          %p247 = pneg %p107
        $region50: #{tpu_custom_call.1} parent=39 // pred_check_branch
          %249 = sbr.rel (%p247) target = $region52
        $region51: #{tpu_custom_call.1} parent=39 // pred_region
          %250 = dma.done [#allocation6], 3072
        $region52: #{tpu_custom_call.1} parent=39 // pred_fallthru
          _
        %s251 = sand.u32 %s31, 1
        %s252 = scalar_lea.sflag [#allocation3], %s251
        %s253 = sand.u32 %s31, 1
        %s254 = smul.addr %s253, 64
        %s255 = scalar_lea.vmem [#allocation2], %s254
        %p256 = pneg %p44
        %p257 = pneg %p41
        %p258 = pneg %p65
        %p259 = pneg %p62
        %p260 = pneg %p86
        %p261 = pneg %p83
        %p262 = pneg %p107
        %p263 = pneg %p104
        %p264 = pneg %p128
        %p265 = pneg %p125
        %p266 = pneg %p154
        %p267 = pneg %p151
        %s268 = sand.u32 %s141, 1
        %s269 = scalar_lea.sflag [#allocation4], %s268
        %s270 = sand.u32 %s141, 1
        %s271 = smul.addr %s270, 8
        %s272 = scalar_lea.vmem [#allocation8], %s271
        %s273 = smul.u32 8, %s23
        %v275 = vld [vmem:[%s238] sm:$0xf]
        %v276 = vld [vmem:[%s238 + $0x4] sm:$0xf]
        %v277 = vld [vmem:[%s238 + $0x8] sm:$0xf]
        %v278 = vld [vmem:[%s238 + $0xc] sm:$0xf]
        %v279 = vld [vmem:[%s238 + $0x10] sm:$0xf]
        %v280 = vld [vmem:[%s238 + $0x14] sm:$0xf]
        %v281 = vld [vmem:[%s238 + $0x18] sm:$0xf]
        %v282 = vld [vmem:[%s238 + $0x1c] sm:$0xf]
        %v283 = vld [vmem:[%s238 + $0x20] sm:$0xf]
        %v284 = vld [vmem:[%s238 + $0x24] sm:$0xf]
        %v285 = vld [vmem:[%s238 + $0x28] sm:$0xf]
        %v286 = vld [vmem:[%s238 + $0x2c] sm:$0xf]
        %v287 = vld [vmem:[%s238 + $0x30] sm:$0xf]
        %v288 = vld [vmem:[%s238 + $0x34] sm:$0xf]
        %v289 = vld [vmem:[%s238 + $0x38] sm:$0xf]
        %v290 = vld [vmem:[%s238 + $0x3c] sm:$0xf]
        %v291 = vld [vmem:[#allocation5] sm:$0xff]
        %v292 = vld [vmem:[#allocation5 + $0x8] sm:$0xff]
        %v293 = vld [vmem:[#allocation5 + $0x10] sm:$0xff]
        %v294 = vld [vmem:[#allocation5 + $0x18] sm:$0xff]
        %v295 = vld [vmem:[#allocation5 + $0x20] sm:$0xff]
        %v296 = vld [vmem:[#allocation5 + $0x28] sm:$0xff]
        %v297 = vld [vmem:[#allocation5 + $0x30] sm:$0xff]
        %v298 = vld [vmem:[#allocation5 + $0x38] sm:$0xff]
        %v299 = vld [vmem:[#allocation5 + $0x40] sm:$0xff]
        %v300 = vld [vmem:[#allocation5 + $0x48] sm:$0xff]
        %v301 = vld [vmem:[#allocation5 + $0x50] sm:$0xff]
        %v302 = vld [vmem:[#allocation5 + $0x58] sm:$0xff]
        %v303 = vld [vmem:[#allocation5 + $0x60] sm:$0xff]
        %v304 = vld [vmem:[#allocation5 + $0x68] sm:$0xff]
        %v305 = vld [vmem:[#allocation5 + $0x70] sm:$0xff]
        %v306 = vld [vmem:[#allocation5 + $0x78] sm:$0xff]
        %v307 = vld [vmem:[#allocation5 + $0x80] sm:$0xff]
        %v308 = vld [vmem:[#allocation5 + $0x88] sm:$0xff]
        %v309 = vld [vmem:[#allocation5 + $0x90] sm:$0xff]
        %v310 = vld [vmem:[#allocation5 + $0x98] sm:$0xff]
        %v311 = vld [vmem:[#allocation5 + $0xa0] sm:$0xff]
        %v312 = vld [vmem:[#allocation5 + $0xa8] sm:$0xff]
        %v313 = vld [vmem:[#allocation5 + $0xb0] sm:$0xff]
        %v314 = vld [vmem:[#allocation5 + $0xb8] sm:$0xff]
        %v331 = vunpack.c.l.b16 %v275
        %v332 = vunpack.c.l.b16 %v276
        %v333 = vunpack.c.l.b16 %v277
        %v334 = vunpack.c.l.b16 %v278
        %v335 = vunpack.c.l.b16 %v279
        %v336 = vunpack.c.l.b16 %v280
        %v337 = vunpack.c.l.b16 %v281
        %v338 = vunpack.c.l.b16 %v282
        %v339 = vunpack.c.l.b16 %v283
        %v340 = vunpack.c.l.b16 %v284
        %v341 = vunpack.c.l.b16 %v285
        %v342 = vunpack.c.l.b16 %v286
        %v343 = vunpack.c.l.b16 %v287
        %v344 = vunpack.c.l.b16 %v288
        %v345 = vunpack.c.l.b16 %v289
        %v346 = vunpack.c.l.b16 %v290
        %v347 = vpack.c.b16 %v332, %v331
        %v348 = vpack.c.b16 %v334, %v333
        %v349 = vpack.c.b16 %v336, %v335
        %v350 = vpack.c.b16 %v338, %v337
        %v351 = vpack.c.b16 %v340, %v339
        %v352 = vpack.c.b16 %v342, %v341
        %v353 = vpack.c.b16 %v344, %v343
        %v354 = vpack.c.b16 %v346, %v345
        %v379 = vunpack.c.l.b16 %v291
        %v380 = vunpack.c.h.b16 %v291
        %v381 = vunpack.c.l.b16 %v292
        %v382 = vunpack.c.h.b16 %v292
        %v383 = vunpack.c.l.b16 %v293
        %v384 = vunpack.c.h.b16 %v293
        %v385 = vunpack.c.l.b16 %v294
        %v386 = vunpack.c.h.b16 %v294
        %v387 = vunpack.c.l.b16 %v295
        %v388 = vunpack.c.h.b16 %v295
        %v389 = vunpack.c.l.b16 %v296
        %v390 = vunpack.c.h.b16 %v296
        %v391 = vunpack.c.l.b16 %v297
        %v392 = vunpack.c.h.b16 %v297
        %v393 = vunpack.c.l.b16 %v298
        %v394 = vunpack.c.h.b16 %v298
        %v395 = vunpack.c.l.b16 %v299
        %v396 = vunpack.c.h.b16 %v299
        %v397 = vunpack.c.l.b16 %v300
        %v398 = vunpack.c.h.b16 %v300
        %v399 = vunpack.c.l.b16 %v301
        %v400 = vunpack.c.h.b16 %v301
        %v401 = vunpack.c.l.b16 %v302
        %v402 = vunpack.c.h.b16 %v302
        %v403 = vunpack.c.l.b16 %v303
        %v404 = vunpack.c.h.b16 %v303
        %v405 = vunpack.c.l.b16 %v304
        %v406 = vunpack.c.h.b16 %v304
        %v407 = vunpack.c.l.b16 %v305
        %v408 = vunpack.c.h.b16 %v305
        %v409 = vunpack.c.l.b16 %v306
        %v410 = vunpack.c.h.b16 %v306
        %v411 = vunpack.c.l.b16 %v307
        %v412 = vunpack.c.h.b16 %v307
        %v413 = vunpack.c.l.b16 %v308
        %v414 = vunpack.c.h.b16 %v308
        %v415 = vunpack.c.l.b16 %v309
        %v416 = vunpack.c.h.b16 %v309
        %v417 = vunpack.c.l.b16 %v310
        %v418 = vunpack.c.h.b16 %v310
        %v419 = vunpack.c.l.b16 %v311
        %v420 = vunpack.c.h.b16 %v311
        %v421 = vunpack.c.l.b16 %v312
        %v422 = vunpack.c.h.b16 %v312
        %v423 = vunpack.c.l.b16 %v313
        %v424 = vunpack.c.h.b16 %v313
        %v425 = vunpack.c.l.b16 %v314
        %v426 = vunpack.c.h.b16 %v314
        %v427 = vpack.c.b16 %v391, %v379
        %v428 = vpack.c.b16 %v392, %v380
        %v429 = vpack.c.b16 %v393, %v381
        %v430 = vpack.c.b16 %v394, %v382
        %v431 = vpack.c.b16 %v395, %v383
        %v432 = vpack.c.b16 %v396, %v384
        %v433 = vpack.c.b16 %v397, %v385
        %v434 = vpack.c.b16 %v398, %v386
        %v435 = vpack.c.b16 %v399, %v387
        %v436 = vpack.c.b16 %v400, %v388
        %v437 = vpack.c.b16 %v401, %v389
        %v438 = vpack.c.b16 %v402, %v390
        %v439 = vpack.c.b16 %v415, %v403
        %v440 = vpack.c.b16 %v416, %v404
        %v441 = vpack.c.b16 %v417, %v405
        %v442 = vpack.c.b16 %v418, %v406
        %v443 = vpack.c.b16 %v419, %v407
        %v444 = vpack.c.b16 %v420, %v408
        %v445 = vpack.c.b16 %v421, %v409
        %v446 = vpack.c.b16 %v422, %v410
        %v447 = vpack.c.b16 %v423, %v411
        %v448 = vpack.c.b16 %v424, %v412
        %v449 = vpack.c.b16 %v425, %v413
        %v450 = vpack.c.b16 %v426, %v414
        %vm475 = vcmask 261120
        %v477 = vsel %vm475, %v347, 0
        %v480 = vsel %vm475, %v348, 0
        %v483 = vsel %vm475, %v349, 0
        %v486 = vsel %vm475, %v350, 0
        %v489 = vsel %vm475, %v351, 0
        %v492 = vsel %vm475, %v352, 0
        %v495 = vsel %vm475, %v353, 0
        %v498 = vsel %vm475, %v354, 0
        %500 = vmatprep.subr.bf16.mxu0 %v428
        %501 = vmatpush1.bf16.msra.mxu0 %v427
        %502 = vmatprep.subr.bf16.mxu0 %v440
        %503 = vmatpush1.bf16.msra.mxu0 %v439
        %504 = vmatprep.subr.bf16.mxu0 0
        %505 = vmatpush1.bf16.msra.mxu0 0
        %506 = vmatprep.subr.bf16.mxu0 0
        %507 = vmatpush1.bf16.msra.mxu0 0
        %508 = vmatprep.subr.bf16.mxu0 0
        %509 = vmatpush1.bf16.msra.mxu0 0
        %510 = vmatprep.subr.bf16.mxu0 0
        %511 = vmatpush1.bf16.msra.mxu0 0
        %512 = vmatprep.subr.bf16.mxu0 0
        %513 = vmatpush1.bf16.msra.mxu0 0
        %514 = vmatprep.subr.bf16.mxu0 0
        %515 = vmatpush1.bf16.msra.mxu0 0
        %516 = vmatprep.subr.bf16.mxu0 0
        %517 = vmatpush1.bf16.msra.mxu0 0
        %518 = vmatprep.subr.bf16.mxu0 0
        %519 = vmatpush1.bf16.msra.mxu0 0
        %520 = vmatprep.subr.bf16.mxu0 0
        %521 = vmatpush1.bf16.msra.mxu0 0
        %522 = vmatprep.subr.bf16.mxu0 0
        %523 = vmatpush1.bf16.msra.mxu0 0
        %524 = vmatprep.subr.bf16.mxu0 0
        %525 = vmatpush1.bf16.msra.mxu0 0
        %526 = vmatprep.subr.bf16.mxu0 0
        %527 = vmatpush1.bf16.msra.mxu0 0
        %528 = vmatprep.subr.bf16.mxu0 0
        %529 = vmatpush1.bf16.msra.mxu0 0
        %530 = vmatprep.subr.bf16.mxu0 0
        %531 = vmatpush1.bf16.msra.mxu0 0
        %532 = vmatprep.mubr.bf16.mxu0 0
        %533 = vmatmul.mubr.bf16.gmra.mrb[0].mxu0 %v477
        %v534 = vpop.f32.mrb[0].mxu0
        %v535 = vadd.f32 0.0, %v534
        %v536 = vpop.f32.mrb[0].mxu0
        %v537 = vadd.f32 0.0, %v536
        %v538 = vpop.f32.mrb[0].mxu0
        %v539 = vadd.f32 0.0, %v538
        %v540 = vpop.f32.mrb[0].mxu0
        %v541 = vadd.f32 0.0, %v540
        %542 = vmatprep.mubr.bf16.mxu0 0
        %543 = vmatmul.mubr.bf16.gmra.mrb[0].mxu0 %v480
        %v544 = vpop.f32.mrb[0].mxu0
        %v545 = vadd.f32 0.0, %v544
        %v546 = vpop.f32.mrb[0].mxu0
        %v547 = vadd.f32 0.0, %v546
        %v548 = vpop.f32.mrb[0].mxu0
        %v549 = vadd.f32 0.0, %v548
        %v550 = vpop.f32.mrb[0].mxu0
        %v551 = vadd.f32 0.0, %v550
        %552 = vmatprep.mubr.bf16.mxu0 0
        %553 = vmatmul.mubr.bf16.gmra.mrb[0].mxu0 %v483
        %v554 = vpop.f32.mrb[0].mxu0
        %v555 = vadd.f32 0.0, %v554
        %v556 = vpop.f32.mrb[0].mxu0
        %v557 = vadd.f32 0.0, %v556
        %v558 = vpop.f32.mrb[0].mxu0
        %v559 = vadd.f32 0.0, %v558
        %v560 = vpop.f32.mrb[0].mxu0
        %v561 = vadd.f32 0.0, %v560
        %562 = vmatprep.mubr.bf16.mxu0 0
        %563 = vmatmul.mubr.bf16.gmra.mrb[0].mxu0 %v486
        %v564 = vpop.f32.mrb[0].mxu0
        %v565 = vadd.f32 0.0, %v564
        %v566 = vpop.f32.mrb[0].mxu0
        %v567 = vadd.f32 0.0, %v566
        %v568 = vpop.f32.mrb[0].mxu0
        %v569 = vadd.f32 0.0, %v568
        %v570 = vpop.f32.mrb[0].mxu0
        %v571 = vadd.f32 0.0, %v570
        %572 = vmatprep.mubr.bf16.mxu0 0
        %573 = vmatmul.mubr.bf16.gmra.mrb[0].mxu0 %v489
        %v574 = vpop.f32.mrb[0].mxu0
        %v575 = vadd.f32 0.0, %v574
        %v576 = vpop.f32.mrb[0].mxu0
        %v577 = vadd.f32 0.0, %v576
        %v578 = vpop.f32.mrb[0].mxu0
        %v579 = vadd.f32 0.0, %v578
        %v580 = vpop.f32.mrb[0].mxu0
        %v581 = vadd.f32 0.0, %v580
        %582 = vmatprep.mubr.bf16.mxu0 0
        %583 = vmatmul.mubr.bf16.gmra.mrb[0].mxu0 %v492
        %v584 = vpop.f32.mrb[0].mxu0
        %v585 = vadd.f32 0.0, %v584
        %v586 = vpop.f32.mrb[0].mxu0
        %v587 = vadd.f32 0.0, %v586
        %v588 = vpop.f32.mrb[0].mxu0
        %v589 = vadd.f32 0.0, %v588
        %v590 = vpop.f32.mrb[0].mxu0
        %v591 = vadd.f32 0.0, %v590
        %592 = vmatprep.mubr.bf16.mxu0 0
        %593 = vmatmul.mubr.bf16.gmra.mrb[0].mxu0 %v495
        %v594 = vpop.f32.mrb[0].mxu0
        %v595 = vadd.f32 0.0, %v594
        %v596 = vpop.f32.mrb[0].mxu0
        %v597 = vadd.f32 0.0, %v596
        %v598 = vpop.f32.mrb[0].mxu0
        %v599 = vadd.f32 0.0, %v598
        %v600 = vpop.f32.mrb[0].mxu0
        %v601 = vadd.f32 0.0, %v600
        %602 = vmatprep.mubr.bf16.mxu0 0
        %603 = vmatmul.mubr.bf16.gmra.mrb[0].mxu0 %v498
        %v604 = vpop.f32.mrb[0].mxu0
        %v605 = vadd.f32 0.0, %v604
        %v606 = vpop.f32.mrb[0].mxu0
        %v607 = vadd.f32 0.0, %v606
        %v608 = vpop.f32.mrb[0].mxu0
        %v609 = vadd.f32 0.0, %v608
        %v610 = vpop.f32.mrb[0].mxu0
        %v611 = vadd.f32 0.0, %v610
        %612 = vdwg.mxu0
        %613 = vmatprep.subr.bf16.mxu0 %v430
        %614 = vmatpush1.bf16.msra.mxu0 %v429
        %615 = vmatprep.subr.bf16.mxu0 %v442
        %616 = vmatpush1.bf16.msra.mxu0 %v441
        %617 = vmatprep.subr.bf16.mxu0 0
        %618 = vmatpush1.bf16.msra.mxu0 0
        %619 = vmatprep.subr.bf16.mxu0 0
        %620 = vmatpush1.bf16.msra.mxu0 0
        %621 = vmatprep.subr.bf16.mxu0 0
        %622 = vmatpush1.bf16.msra.mxu0 0
        %623 = vmatprep.subr.bf16.mxu0 0
        %624 = vmatpush1.bf16.msra.mxu0 0
        %625 = vmatprep.subr.bf16.mxu0 0
        %626 = vmatpush1.bf16.msra.mxu0 0
        %627 = vmatprep.subr.bf16.mxu0 0
        %628 = vmatpush1.bf16.msra.mxu0 0
        %629 = vmatprep.subr.bf16.mxu0 0
        %630 = vmatpush1.bf16.msra.mxu0 0
        %631 = vmatprep.subr.bf16.mxu0 0
        %632 = vmatpush1.bf16.msra.mxu0 0
        %633 = vmatprep.subr.bf16.mxu0 0
        %634 = vmatpush1.bf16.msra.mxu0 0
        %635 = vmatprep.subr.bf16.mxu0 0
        %636 = vmatpush1.bf16.msra.mxu0 0
        %637 = vmatprep.subr.bf16.mxu0 0
        %638 = vmatpush1.bf16.msra.mxu0 0
        %639 = vmatprep.subr.bf16.mxu0 0
        %640 = vmatpush1.bf16.msra.mxu0 0
        %641 = vmatprep.subr.bf16.mxu0 0
        %642 = vmatpush1.bf16.msra.mxu0 0
        %643 = vmatprep.subr.bf16.mxu0 0
        %644 = vmatpush1.bf16.msra.mxu0 0
        %645 = vmatprep.mubr.bf16.mxu0 0
        %646 = vmatmul.mubr.bf16.gmra.mrb[0].mxu0 %v477
        %v647 = vpop.f32.mrb[0].mxu0
        %v648 = vadd.f32 0.0, %v647
        %v649 = vpop.f32.mrb[0].mxu0
        %v650 = vadd.f32 0.0, %v649
        %v651 = vpop.f32.mrb[0].mxu0
        %v652 = vadd.f32 0.0, %v651
        %v653 = vpop.f32.mrb[0].mxu0
        %v654 = vadd.f32 0.0, %v653
        %655 = vmatprep.mubr.bf16.mxu0 0
        %656 = vmatmul.mubr.bf16.gmra.mrb[0].mxu0 %v480
        %v657 = vpop.f32.mrb[0].mxu0
        %v658 = vadd.f32 0.0, %v657
        %v659 = vpop.f32.mrb[0].mxu0
        %v660 = vadd.f32 0.0, %v659
        %v661 = vpop.f32.mrb[0].mxu0
        %v662 = vadd.f32 0.0, %v661
        %v663 = vpop.f32.mrb[0].mxu0
        %v664 = vadd.f32 0.0, %v663
        %665 = vmatprep.mubr.bf16.mxu0 0
        %666 = vmatmul.mubr.bf16.gmra.mrb[0].mxu0 %v483
        %v667 = vpop.f32.mrb[0].mxu0
        %v668 = vadd.f32 0.0, %v667
        %v669 = vpop.f32.mrb[0].mxu0
        %v670 = vadd.f32 0.0, %v669
        %v671 = vpop.f32.mrb[0].mxu0
        %v672 = vadd.f32 0.0, %v671
        %v673 = vpop.f32.mrb[0].mxu0
        %v674 = vadd.f32 0.0, %v673
        %675 = vmatprep.mubr.bf16.mxu0 0
        %676 = vmatmul.mubr.bf16.gmra.mrb[0].mxu0 %v486
        %v677 = vpop.f32.mrb[0].mxu0
        %v678 = vadd.f32 0.0, %v677
        %v679 = vpop.f32.mrb[0].mxu0
        %v680 = vadd.f32 0.0, %v679
        %v681 = vpop.f32.mrb[0].mxu0
        %v682 = vadd.f32 0.0, %v681
        %v683 = vpop.f32.mrb[0].mxu0
        %v684 = vadd.f32 0.0, %v683
        %685 = vmatprep.mubr.bf16.mxu0 0
        %686 = vmatmul.mubr.bf16.gmra.mrb[0].mxu0 %v489
        %v687 = vpop.f32.mrb[0].mxu0
        %v688 = vadd.f32 0.0, %v687
        %v689 = vpop.f32.mrb[0].mxu0
        %v690 = vadd.f32 0.0, %v689
        %v691 = vpop.f32.mrb[0].mxu0
        %v692 = vadd.f32 0.0, %v691
        %v693 = vpop.f32.mrb[0].mxu0
        %v694 = vadd.f32 0.0, %v693
        %695 = vmatprep.mubr.bf16.mxu0 0
        %696 = vmatmul.mubr.bf16.gmra.mrb[0].mxu0 %v492
        %v697 = vpop.f32.mrb[0].mxu0
        %v698 = vadd.f32 0.0, %v697
        %v699 = vpop.f32.mrb[0].mxu0
        %v700 = vadd.f32 0.0, %v699
        %v701 = vpop.f32.mrb[0].mxu0
        %v702 = vadd.f32 0.0, %v701
        %v703 = vpop.f32.mrb[0].mxu0
        %v704 = vadd.f32 0.0, %v703
        %705 = vmatprep.mubr.bf16.mxu0 0
        %706 = vmatmul.mubr.bf16.gmra.mrb[0].mxu0 %v495
        %v707 = vpop.f32.mrb[0].mxu0
        %v708 = vadd.f32 0.0, %v707
        %v709 = vpop.f32.mrb[0].mxu0
        %v710 = vadd.f32 0.0, %v709
        %v711 = vpop.f32.mrb[0].mxu0
        %v712 = vadd.f32 0.0, %v711
        %v713 = vpop.f32.mrb[0].mxu0
        %v714 = vadd.f32 0.0, %v713
        %715 = vmatprep.mubr.bf16.mxu0 0
        %716 = vmatmul.mubr.bf16.gmra.mrb[0].mxu0 %v498
        %v717 = vpop.f32.mrb[0].mxu0
        %v718 = vadd.f32 0.0, %v717
        %v719 = vpop.f32.mrb[0].mxu0
        %v720 = vadd.f32 0.0, %v719
        %v721 = vpop.f32.mrb[0].mxu0
        %v722 = vadd.f32 0.0, %v721
        %v723 = vpop.f32.mrb[0].mxu0
        %v724 = vadd.f32 0.0, %v723
        %725 = vdwg.mxu0
        %726 = vmatprep.subr.bf16.mxu0 %v432
        %727 = vmatpush1.bf16.msra.mxu0 %v431
        %728 = vmatprep.subr.bf16.mxu0 %v444
        %729 = vmatpush1.bf16.msra.mxu0 %v443
        %730 = vmatprep.subr.bf16.mxu0 0
        %731 = vmatpush1.bf16.msra.mxu0 0
        %732 = vmatprep.subr.bf16.mxu0 0
        %733 = vmatpush1.bf16.msra.mxu0 0
        %734 = vmatprep.subr.bf16.mxu0 0
        %735 = vmatpush1.bf16.msra.mxu0 0
        %736 = vmatprep.subr.bf16.mxu0 0
        %737 = vmatpush1.bf16.msra.mxu0 0
        %738 = vmatprep.subr.bf16.mxu0 0
        %739 = vmatpush1.bf16.msra.mxu0 0
        %740 = vmatprep.subr.bf16.mxu0 0
        %741 = vmatpush1.bf16.msra.mxu0 0
        %742 = vmatprep.subr.bf16.mxu0 0
        %743 = vmatpush1.bf16.msra.mxu0 0
        %744 = vmatprep.subr.bf16.mxu0 0
        %745 = vmatpush1.bf16.msra.mxu0 0
        %746 = vmatprep.subr.bf16.mxu0 0
        %747 = vmatpush1.bf16.msra.mxu0 0
        %748 = vmatprep.subr.bf16.mxu0 0
        %749 = vmatpush1.bf16.msra.mxu0 0
        %750 = vmatprep.subr.bf16.mxu0 0
        %751 = vmatpush1.bf16.msra.mxu0 0
        %752 = vmatprep.subr.bf16.mxu0 0
        %753 = vmatpush1.bf16.msra.mxu0 0
        %754 = vmatprep.subr.bf16.mxu0 0
        %755 = vmatpush1.bf16.msra.mxu0 0
        %756 = vmatprep.subr.bf16.mxu0 0
        %757 = vmatpush1.bf16.msra.mxu0 0
        %758 = vmatprep.mubr.bf16.mxu0 0
        %759 = vmatmul.mubr.bf16.gmra.mrb[0].mxu0 %v477
        %v760 = vpop.f32.mrb[0].mxu0
        %v761 = vadd.f32 0.0, %v760
        %v762 = vpop.f32.mrb[0].mxu0
        %v763 = vadd.f32 0.0, %v762
        %v764 = vpop.f32.mrb[0].mxu0
        %v765 = vadd.f32 0.0, %v764
        %v766 = vpop.f32.mrb[0].mxu0
        %v767 = vadd.f32 0.0, %v766
        %768 = vmatprep.mubr.bf16.mxu0 0
        %769 = vmatmul.mubr.bf16.gmra.mrb[0].mxu0 %v480
        %v770 = vpop.f32.mrb[0].mxu0
        %v771 = vadd.f32 0.0, %v770
        %v772 = vpop.f32.mrb[0].mxu0
        %v773 = vadd.f32 0.0, %v772
        %v774 = vpop.f32.mrb[0].mxu0
        %v775 = vadd.f32 0.0, %v774
        %v776 = vpop.f32.mrb[0].mxu0
        %v777 = vadd.f32 0.0, %v776
        %778 = vmatprep.mubr.bf16.mxu0 0
        %779 = vmatmul.mubr.bf16.gmra.mrb[0].mxu0 %v483
        %v780 = vpop.f32.mrb[0].mxu0
        %v781 = vadd.f32 0.0, %v780
        %v782 = vpop.f32.mrb[0].mxu0
        %v783 = vadd.f32 0.0, %v782
        %v784 = vpop.f32.mrb[0].mxu0
        %v785 = vadd.f32 0.0, %v784
        %v786 = vpop.f32.mrb[0].mxu0
        %v787 = vadd.f32 0.0, %v786
        %788 = vmatprep.mubr.bf16.mxu0 0
        %789 = vmatmul.mubr.bf16.gmra.mrb[0].mxu0 %v486
        %v790 = vpop.f32.mrb[0].mxu0
        %v791 = vadd.f32 0.0, %v790
        %v792 = vpop.f32.mrb[0].mxu0
        %v793 = vadd.f32 0.0, %v792
        %v794 = vpop.f32.mrb[0].mxu0
        %v795 = vadd.f32 0.0, %v794
        %v796 = vpop.f32.mrb[0].mxu0
        %v797 = vadd.f32 0.0, %v796
        %798 = vmatprep.mubr.bf16.mxu0 0
        %799 = vmatmul.mubr.bf16.gmra.mrb[0].mxu0 %v489
        %v800 = vpop.f32.mrb[0].mxu0
        %v801 = vadd.f32 0.0, %v800
        %v802 = vpop.f32.mrb[0].mxu0
        %v803 = vadd.f32 0.0, %v802
        %v804 = vpop.f32.mrb[0].mxu0
        %v805 = vadd.f32 0.0, %v804
        %v806 = vpop.f32.mrb[0].mxu0
        %v807 = vadd.f32 0.0, %v806
        %808 = vmatprep.mubr.bf16.mxu0 0
        %809 = vmatmul.mubr.bf16.gmra.mrb[0].mxu0 %v492
        %v810 = vpop.f32.mrb[0].mxu0
        %v811 = vadd.f32 0.0, %v810
        %v812 = vpop.f32.mrb[0].mxu0
        %v813 = vadd.f32 0.0, %v812
        %v814 = vpop.f32.mrb[0].mxu0
        %v815 = vadd.f32 0.0, %v814
        %v816 = vpop.f32.mrb[0].mxu0
        %v817 = vadd.f32 0.0, %v816
        %818 = vmatprep.mubr.bf16.mxu0 0
        %819 = vmatmul.mubr.bf16.gmra.mrb[0].mxu0 %v495
        %v820 = vpop.f32.mrb[0].mxu0
        %v821 = vadd.f32 0.0, %v820
        %v822 = vpop.f32.mrb[0].mxu0
        %v823 = vadd.f32 0.0, %v822
        %v824 = vpop.f32.mrb[0].mxu0
        %v825 = vadd.f32 0.0, %v824
        %v826 = vpop.f32.mrb[0].mxu0
        %v827 = vadd.f32 0.0, %v826
        %828 = vmatprep.mubr.bf16.mxu0 0
        %829 = vmatmul.mubr.bf16.gmra.mrb[0].mxu0 %v498
        %v830 = vpop.f32.mrb[0].mxu0
        %v831 = vadd.f32 0.0, %v830
        %v832 = vpop.f32.mrb[0].mxu0
        %v833 = vadd.f32 0.0, %v832
        %v834 = vpop.f32.mrb[0].mxu0
        %v835 = vadd.f32 0.0, %v834
        %v836 = vpop.f32.mrb[0].mxu0
        %v837 = vadd.f32 0.0, %v836
        %838 = vdwg.mxu0
        %839 = vmatprep.subr.bf16.mxu0 %v434
        %840 = vmatpush1.bf16.msra.mxu0 %v433
        %841 = vmatprep.subr.bf16.mxu0 %v446
        %842 = vmatpush1.bf16.msra.mxu0 %v445
        %843 = vmatprep.subr.bf16.mxu0 0
        %844 = vmatpush1.bf16.msra.mxu0 0
        %845 = vmatprep.subr.bf16.mxu0 0
        %846 = vmatpush1.bf16.msra.mxu0 0
        %847 = vmatprep.subr.bf16.mxu0 0
        %848 = vmatpush1.bf16.msra.mxu0 0
        %849 = vmatprep.subr.bf16.mxu0 0
        %850 = vmatpush1.bf16.msra.mxu0 0
        %851 = vmatprep.subr.bf16.mxu0 0
        %852 = vmatpush1.bf16.msra.mxu0 0
        %853 = vmatprep.subr.bf16.mxu0 0
        %854 = vmatpush1.bf16.msra.mxu0 0
        %855 = vmatprep.subr.bf16.mxu0 0
        %856 = vmatpush1.bf16.msra.mxu0 0
        %857 = vmatprep.subr.bf16.mxu0 0
        %858 = vmatpush1.bf16.msra.mxu0 0
        %859 = vmatprep.subr.bf16.mxu0 0
        %860 = vmatpush1.bf16.msra.mxu0 0
        %861 = vmatprep.subr.bf16.mxu0 0
        %862 = vmatpush1.bf16.msra.mxu0 0
        %863 = vmatprep.subr.bf16.mxu0 0
        %864 = vmatpush1.bf16.msra.mxu0 0
        %865 = vmatprep.subr.bf16.mxu0 0
        %866 = vmatpush1.bf16.msra.mxu0 0
        %867 = vmatprep.subr.bf16.mxu0 0
        %868 = vmatpush1.bf16.msra.mxu0 0
        %869 = vmatprep.subr.bf16.mxu0 0
        %870 = vmatpush1.bf16.msra.mxu0 0
        %871 = vmatprep.mubr.bf16.mxu0 0
        %872 = vmatmul.mubr.bf16.gmra.mrb[0].mxu0 %v477
        %v873 = vpop.f32.mrb[0].mxu0
        %v874 = vadd.f32 0.0, %v873
        %v875 = vpop.f32.mrb[0].mxu0
        %v876 = vadd.f32 0.0, %v875
        %v877 = vpop.f32.mrb[0].mxu0
        %v878 = vadd.f32 0.0, %v877
        %v879 = vpop.f32.mrb[0].mxu0
        %v880 = vadd.f32 0.0, %v879
        %881 = vmatprep.mubr.bf16.mxu0 0
        %882 = vmatmul.mubr.bf16.gmra.mrb[0].mxu0 %v480
        %v883 = vpop.f32.mrb[0].mxu0
        %v884 = vadd.f32 0.0, %v883
        %v885 = vpop.f32.mrb[0].mxu0
        %v886 = vadd.f32 0.0, %v885
        %v887 = vpop.f32.mrb[0].mxu0
        %v888 = vadd.f32 0.0, %v887
        %v889 = vpop.f32.mrb[0].mxu0
        %v890 = vadd.f32 0.0, %v889
        %891 = vmatprep.mubr.bf16.mxu0 0
        %892 = vmatmul.mubr.bf16.gmra.mrb[0].mxu0 %v483
        %v893 = vpop.f32.mrb[0].mxu0
        %v894 = vadd.f32 0.0, %v893
        %v895 = vpop.f32.mrb[0].mxu0
        %v896 = vadd.f32 0.0, %v895
        %v897 = vpop.f32.mrb[0].mxu0
        %v898 = vadd.f32 0.0, %v897
        %v899 = vpop.f32.mrb[0].mxu0
        %v900 = vadd.f32 0.0, %v899
        %901 = vmatprep.mubr.bf16.mxu0 0
        %902 = vmatmul.mubr.bf16.gmra.mrb[0].mxu0 %v486
        %v903 = vpop.f32.mrb[0].mxu0
        %v904 = vadd.f32 0.0, %v903
        %v905 = vpop.f32.mrb[0].mxu0
        %v906 = vadd.f32 0.0, %v905
        %v907 = vpop.f32.mrb[0].mxu0
        %v908 = vadd.f32 0.0, %v907
        %v909 = vpop.f32.mrb[0].mxu0
        %v910 = vadd.f32 0.0, %v909
        %911 = vmatprep.mubr.bf16.mxu0 0
        %912 = vmatmul.mubr.bf16.gmra.mrb[0].mxu0 %v489
        %v913 = vpop.f32.mrb[0].mxu0
        %v914 = vadd.f32 0.0, %v913
        %v915 = vpop.f32.mrb[0].mxu0
        %v916 = vadd.f32 0.0, %v915
        %v917 = vpop.f32.mrb[0].mxu0
        %v918 = vadd.f32 0.0, %v917
        %v919 = vpop.f32.mrb[0].mxu0
        %v920 = vadd.f32 0.0, %v919
        %921 = vmatprep.mubr.bf16.mxu0 0
        %922 = vmatmul.mubr.bf16.gmra.mrb[0].mxu0 %v492
        %v923 = vpop.f32.mrb[0].mxu0
        %v924 = vadd.f32 0.0, %v923
        %v925 = vpop.f32.mrb[0].mxu0
        %v926 = vadd.f32 0.0, %v925
        %v927 = vpop.f32.mrb[0].mxu0
        %v928 = vadd.f32 0.0, %v927
        %v929 = vpop.f32.mrb[0].mxu0
        %v930 = vadd.f32 0.0, %v929
        %931 = vmatprep.mubr.bf16.mxu0 0
        %932 = vmatmul.mubr.bf16.gmra.mrb[0].mxu0 %v495
        %v933 = vpop.f32.mrb[0].mxu0
        %v934 = vadd.f32 0.0, %v933
        %v935 = vpop.f32.mrb[0].mxu0
        %v936 = vadd.f32 0.0, %v935
        %v937 = vpop.f32.mrb[0].mxu0
        %v938 = vadd.f32 0.0, %v937
        %v939 = vpop.f32.mrb[0].mxu0
        %v940 = vadd.f32 0.0, %v939
        %941 = vmatprep.mubr.bf16.mxu0 0
        %942 = vmatmul.mubr.bf16.gmra.mrb[0].mxu0 %v498
        %v943 = vpop.f32.mrb[0].mxu0
        %v944 = vadd.f32 0.0, %v943
        %v945 = vpop.f32.mrb[0].mxu0
        %v946 = vadd.f32 0.0, %v945
        %v947 = vpop.f32.mrb[0].mxu0
        %v948 = vadd.f32 0.0, %v947
        %v949 = vpop.f32.mrb[0].mxu0
        %v950 = vadd.f32 0.0, %v949
        %951 = vdwg.mxu0
        %952 = vmatprep.subr.bf16.mxu0 %v436
        %953 = vmatpush1.bf16.msra.mxu0 %v435
        %954 = vmatprep.subr.bf16.mxu0 %v448
        %955 = vmatpush1.bf16.msra.mxu0 %v447
        %956 = vmatprep.subr.bf16.mxu0 0
        %957 = vmatpush1.bf16.msra.mxu0 0
        %958 = vmatprep.subr.bf16.mxu0 0
        %959 = vmatpush1.bf16.msra.mxu0 0
        %960 = vmatprep.subr.bf16.mxu0 0
        %961 = vmatpush1.bf16.msra.mxu0 0
        %962 = vmatprep.subr.bf16.mxu0 0
        %963 = vmatpush1.bf16.msra.mxu0 0
        %964 = vmatprep.subr.bf16.mxu0 0
        %965 = vmatpush1.bf16.msra.mxu0 0
        %966 = vmatprep.subr.bf16.mxu0 0
        %967 = vmatpush1.bf16.msra.mxu0 0
        %968 = vmatprep.subr.bf16.mxu0 0
        %969 = vmatpush1.bf16.msra.mxu0 0
        %970 = vmatprep.subr.bf16.mxu0 0
        %971 = vmatpush1.bf16.msra.mxu0 0
        %972 = vmatprep.subr.bf16.mxu0 0
        %973 = vmatpush1.bf16.msra.mxu0 0
        %974 = vmatprep.subr.bf16.mxu0 0
        %975 = vmatpush1.bf16.msra.mxu0 0
        %976 = vmatprep.subr.bf16.mxu0 0
        %977 = vmatpush1.bf16.msra.mxu0 0
        %978 = vmatprep.subr.bf16.mxu0 0
        %979 = vmatpush1.bf16.msra.mxu0 0
        %980 = vmatprep.subr.bf16.mxu0 0
        %981 = vmatpush1.bf16.msra.mxu0 0
        %982 = vmatprep.subr.bf16.mxu0 0
        %983 = vmatpush1.bf16.msra.mxu0 0
        %984 = vmatprep.mubr.bf16.mxu0 0
        %985 = vmatmul.mubr.bf16.gmra.mrb[0].mxu0 %v477
        %v986 = vpop.f32.mrb[0].mxu0
        %v987 = vadd.f32 0.0, %v986
        %v988 = vpop.f32.mrb[0].mxu0
        %v989 = vadd.f32 0.0, %v988
        %v990 = vpop.f32.mrb[0].mxu0
        %v991 = vadd.f32 0.0, %v990
        %v992 = vpop.f32.mrb[0].mxu0
        %v993 = vadd.f32 0.0, %v992
        %994 = vmatprep.mubr.bf16.mxu0 0
        %995 = vmatmul.mubr.bf16.gmra.mrb[0].mxu0 %v480
        %v996 = vpop.f32.mrb[0].mxu0
        %v997 = vadd.f32 0.0, %v996
        %v998 = vpop.f32.mrb[0].mxu0
        %v999 = vadd.f32 0.0, %v998
        %v1000 = vpop.f32.mrb[0].mxu0
        %v1001 = vadd.f32 0.0, %v1000
        %v1002 = vpop.f32.mrb[0].mxu0
        %v1003 = vadd.f32 0.0, %v1002
        %1004 = vmatprep.mubr.bf16.mxu0 0
        %1005 = vmatmul.mubr.bf16.gmra.mrb[0].mxu0 %v483
        %v1006 = vpop.f32.mrb[0].mxu0
        %v1007 = vadd.f32 0.0, %v1006
        %v1008 = vpop.f32.mrb[0].mxu0
        %v1009 = vadd.f32 0.0, %v1008
        %v1010 = vpop.f32.mrb[0].mxu0
        %v1011 = vadd.f32 0.0, %v1010
        %v1012 = vpop.f32.mrb[0].mxu0
        %v1013 = vadd.f32 0.0, %v1012
        %1014 = vmatprep.mubr.bf16.mxu0 0
        %1015 = vmatmul.mubr.bf16.gmra.mrb[0].mxu0 %v486
        %v1016 = vpop.f32.mrb[0].mxu0
        %v1017 = vadd.f32 0.0, %v1016
        %v1018 = vpop.f32.mrb[0].mxu0
        %v1019 = vadd.f32 0.0, %v1018
        %v1020 = vpop.f32.mrb[0].mxu0
        %v1021 = vadd.f32 0.0, %v1020
        %v1022 = vpop.f32.mrb[0].mxu0
        %v1023 = vadd.f32 0.0, %v1022
        %1024 = vmatprep.mubr.bf16.mxu0 0
        %1025 = vmatmul.mubr.bf16.gmra.mrb[0].mxu0 %v489
        %v1026 = vpop.f32.mrb[0].mxu0
        %v1027 = vadd.f32 0.0, %v1026
        %v1028 = vpop.f32.mrb[0].mxu0
        %v1029 = vadd.f32 0.0, %v1028
        %v1030 = vpop.f32.mrb[0].mxu0
        %v1031 = vadd.f32 0.0, %v1030
        %v1032 = vpop.f32.mrb[0].mxu0
        %v1033 = vadd.f32 0.0, %v1032
        %1034 = vmatprep.mubr.bf16.mxu0 0
        %1035 = vmatmul.mubr.bf16.gmra.mrb[0].mxu0 %v492
        %v1036 = vpop.f32.mrb[0].mxu0
        %v1037 = vadd.f32 0.0, %v1036
        %v1038 = vpop.f32.mrb[0].mxu0
        %v1039 = vadd.f32 0.0, %v1038
        %v1040 = vpop.f32.mrb[0].mxu0
        %v1041 = vadd.f32 0.0, %v1040
        %v1042 = vpop.f32.mrb[0].mxu0
        %v1043 = vadd.f32 0.0, %v1042
        %1044 = vmatprep.mubr.bf16.mxu0 0
        %1045 = vmatmul.mubr.bf16.gmra.mrb[0].mxu0 %v495
        %v1046 = vpop.f32.mrb[0].mxu0
        %v1047 = vadd.f32 0.0, %v1046
        %v1048 = vpop.f32.mrb[0].mxu0
        %v1049 = vadd.f32 0.0, %v1048
        %v1050 = vpop.f32.mrb[0].mxu0
        %v1051 = vadd.f32 0.0, %v1050
        %v1052 = vpop.f32.mrb[0].mxu0
        %v1053 = vadd.f32 0.0, %v1052
        %1054 = vmatprep.mubr.bf16.mxu0 0
        %1055 = vmatmul.mubr.bf16.gmra.mrb[0].mxu0 %v498
        %v1056 = vpop.f32.mrb[0].mxu0
        %v1057 = vadd.f32 0.0, %v1056
        %v1058 = vpop.f32.mrb[0].mxu0
        %v1059 = vadd.f32 0.0, %v1058
        %v1060 = vpop.f32.mrb[0].mxu0
        %v1061 = vadd.f32 0.0, %v1060
        %v1062 = vpop.f32.mrb[0].mxu0
        %v1063 = vadd.f32 0.0, %v1062
        %1064 = vdwg.mxu0
        %1065 = vmatprep.subr.bf16.mxu0 %v438
        %1066 = vmatpush1.bf16.msra.mxu0 %v437
        %1067 = vmatprep.subr.bf16.mxu0 %v450
        %1068 = vmatpush1.bf16.msra.mxu0 %v449
        %1069 = vmatprep.subr.bf16.mxu0 0
        %1070 = vmatpush1.bf16.msra.mxu0 0
        %1071 = vmatprep.subr.bf16.mxu0 0
        %1072 = vmatpush1.bf16.msra.mxu0 0
        %1073 = vmatprep.subr.bf16.mxu0 0
        %1074 = vmatpush1.bf16.msra.mxu0 0
        %1075 = vmatprep.subr.bf16.mxu0 0
        %1076 = vmatpush1.bf16.msra.mxu0 0
        %1077 = vmatprep.subr.bf16.mxu0 0
        %1078 = vmatpush1.bf16.msra.mxu0 0
        %1079 = vmatprep.subr.bf16.mxu0 0
        %1080 = vmatpush1.bf16.msra.mxu0 0
        %1081 = vmatprep.subr.bf16.mxu0 0
        %1082 = vmatpush1.bf16.msra.mxu0 0
        %1083 = vmatprep.subr.bf16.mxu0 0
        %1084 = vmatpush1.bf16.msra.mxu0 0
        %1085 = vmatprep.subr.bf16.mxu0 0
        %1086 = vmatpush1.bf16.msra.mxu0 0
        %1087 = vmatprep.subr.bf16.mxu0 0
        %1088 = vmatpush1.bf16.msra.mxu0 0
        %1089 = vmatprep.subr.bf16.mxu0 0
        %1090 = vmatpush1.bf16.msra.mxu0 0
        %1091 = vmatprep.subr.bf16.mxu0 0
        %1092 = vmatpush1.bf16.msra.mxu0 0
        %1093 = vmatprep.subr.bf16.mxu0 0
        %1094 = vmatpush1.bf16.msra.mxu0 0
        %1095 = vmatprep.subr.bf16.mxu0 0
        %1096 = vmatpush1.bf16.msra.mxu0 0
        %1097 = vmatprep.mubr.bf16.mxu0 0
        %1098 = vmatmul.mubr.bf16.gmra.mrb[0].mxu0 %v477
        %v1099 = vpop.f32.mrb[0].mxu0
        %v1100 = vadd.f32 0.0, %v1099
        %v1101 = vpop.f32.mrb[0].mxu0
        %v1102 = vadd.f32 0.0, %v1101
        %v1103 = vpop.f32.mrb[0].mxu0
        %v1104 = vadd.f32 0.0, %v1103
        %v1105 = vpop.f32.mrb[0].mxu0
        %v1106 = vadd.f32 0.0, %v1105
        %1107 = vmatprep.mubr.bf16.mxu0 0
        %1108 = vmatmul.mubr.bf16.gmra.mrb[0].mxu0 %v480
        %v1109 = vpop.f32.mrb[0].mxu0
        %v1110 = vadd.f32 0.0, %v1109
        %v1111 = vpop.f32.mrb[0].mxu0
        %v1112 = vadd.f32 0.0, %v1111
        %v1113 = vpop.f32.mrb[0].mxu0
        %v1114 = vadd.f32 0.0, %v1113
        %v1115 = vpop.f32.mrb[0].mxu0
        %v1116 = vadd.f32 0.0, %v1115
        %1117 = vmatprep.mubr.bf16.mxu0 0
        %1118 = vmatmul.mubr.bf16.gmra.mrb[0].mxu0 %v483
        %v1119 = vpop.f32.mrb[0].mxu0
        %v1120 = vadd.f32 0.0, %v1119
        %v1121 = vpop.f32.mrb[0].mxu0
        %v1122 = vadd.f32 0.0, %v1121
        %v1123 = vpop.f32.mrb[0].mxu0
        %v1124 = vadd.f32 0.0, %v1123
        %v1125 = vpop.f32.mrb[0].mxu0
        %v1126 = vadd.f32 0.0, %v1125
        %1127 = vmatprep.mubr.bf16.mxu0 0
        %1128 = vmatmul.mubr.bf16.gmra.mrb[0].mxu0 %v486
        %v1129 = vpop.f32.mrb[0].mxu0
        %v1130 = vadd.f32 0.0, %v1129
        %v1131 = vpop.f32.mrb[0].mxu0
        %v1132 = vadd.f32 0.0, %v1131
        %v1133 = vpop.f32.mrb[0].mxu0
        %v1134 = vadd.f32 0.0, %v1133
        %v1135 = vpop.f32.mrb[0].mxu0
        %v1136 = vadd.f32 0.0, %v1135
        %1137 = vmatprep.mubr.bf16.mxu0 0
        %1138 = vmatmul.mubr.bf16.gmra.mrb[0].mxu0 %v489
        %v1139 = vpop.f32.mrb[0].mxu0
        %v1140 = vadd.f32 0.0, %v1139
        %v1141 = vpop.f32.mrb[0].mxu0
        %v1142 = vadd.f32 0.0, %v1141
        %v1143 = vpop.f32.mrb[0].mxu0
        %v1144 = vadd.f32 0.0, %v1143
        %v1145 = vpop.f32.mrb[0].mxu0
        %v1146 = vadd.f32 0.0, %v1145
        %1147 = vmatprep.mubr.bf16.mxu0 0
        %1148 = vmatmul.mubr.bf16.gmra.mrb[0].mxu0 %v492
        %v1149 = vpop.f32.mrb[0].mxu0
        %v1150 = vadd.f32 0.0, %v1149
        %v1151 = vpop.f32.mrb[0].mxu0
        %v1152 = vadd.f32 0.0, %v1151
        %v1153 = vpop.f32.mrb[0].mxu0
        %v1154 = vadd.f32 0.0, %v1153
        %v1155 = vpop.f32.mrb[0].mxu0
        %v1156 = vadd.f32 0.0, %v1155
        %1157 = vmatprep.mubr.bf16.mxu0 0
        %1158 = vmatmul.mubr.bf16.gmra.mrb[0].mxu0 %v495
        %v1159 = vpop.f32.mrb[0].mxu0
        %v1160 = vadd.f32 0.0, %v1159
        %v1161 = vpop.f32.mrb[0].mxu0
        %v1162 = vadd.f32 0.0, %v1161
        %v1163 = vpop.f32.mrb[0].mxu0
        %v1164 = vadd.f32 0.0, %v1163
        %v1165 = vpop.f32.mrb[0].mxu0
        %v1166 = vadd.f32 0.0, %v1165
        %1167 = vmatprep.mubr.bf16.mxu0 0
        %1168 = vmatmul.mubr.bf16.gmra.mrb[0].mxu0 %v498
        %v1169 = vpop.f32.mrb[0].mxu0
        %v1170 = vadd.f32 0.0, %v1169
        %v1171 = vpop.f32.mrb[0].mxu0
        %v1172 = vadd.f32 0.0, %v1171
        %v1173 = vpop.f32.mrb[0].mxu0
        %v1174 = vadd.f32 0.0, %v1173
        %v1175 = vpop.f32.mrb[0].mxu0
        %v1176 = vadd.f32 0.0, %v1175
        %1177 = vdwg.mxu0
        %v1178 = vlaneseq
        %v1179 = vshrl.u32 %v1178, 7
        %v1180 = vadd.s32 %v1179, 8
        %v1181 = vrot.slane %v537, 1
        %v1182 = vrot.slane %v541, 1
        %v1183 = vrot.slane %v547, 1
        %v1184 = vrot.slane %v551, 1
        %v1185 = vrot.slane %v557, 1
        %v1186 = vrot.slane %v561, 1
        %v1187 = vrot.slane %v567, 1
        %v1188 = vrot.slane %v571, 1
        %v1189 = vrot.slane %v577, 1
        %v1190 = vrot.slane %v581, 1
        %v1191 = vrot.slane %v587, 1
        %v1192 = vrot.slane %v591, 1
        %v1193 = vrot.slane %v597, 1
        %v1194 = vrot.slane %v601, 1
        %v1195 = vrot.slane %v607, 1
        %v1196 = vrot.slane %v611, 1
        %vm1197 = vcmp.lt.s32.totalorder %v1179, 7
        %v1198 = vsel %vm1197, %v1195, %v1196
        %v1199 = vsel %vm1197, %v1194, %v1195
        %v1200 = vsel %vm1197, %v1193, %v1194
        %v1201 = vsel %vm1197, %v1192, %v1193
        %v1202 = vsel %vm1197, %v1191, %v1192
        %v1203 = vsel %vm1197, %v1190, %v1191
        %v1204 = vsel %vm1197, %v1189, %v1190
        %v1205 = vsel %vm1197, %v1188, %v1189
        %v1206 = vsel %vm1197, %v1187, %v1188
        %v1207 = vsel %vm1197, %v1186, %v1187
        %v1208 = vsel %vm1197, %v1185, %v1186
        %v1209 = vsel %vm1197, %v1184, %v1185
        %v1210 = vsel %vm1197, %v1183, %v1184
        %v1211 = vsel %vm1197, %v1182, %v1183
        %v1212 = vsel %vm1197, %v1181, %v1182
        %v1213 = vsel %vm1197, %v1196, %v1181
        %v1214 = vadd.f32 %v535, %v1212
        %v1215 = vadd.f32 %v539, %v1211
        %v1216 = vadd.f32 %v545, %v1210
        %v1217 = vadd.f32 %v549, %v1209
        %v1218 = vadd.f32 %v555, %v1208
        %v1219 = vadd.f32 %v559, %v1207
        %v1220 = vadd.f32 %v565, %v1206
        %v1221 = vadd.f32 %v569, %v1205
        %v1222 = vadd.f32 %v575, %v1204
        %v1223 = vadd.f32 %v579, %v1203
        %v1224 = vadd.f32 %v585, %v1202
        %v1225 = vadd.f32 %v589, %v1201
        %v1226 = vadd.f32 %v595, %v1200
        %v1227 = vadd.f32 %v599, %v1199
        %v1228 = vadd.f32 %v605, %v1198
        %v1229 = vadd.f32 %v609, %v1213
        %v1230 = vrot.slane %v648, 2
        %v1231 = vrot.slane %v652, 2
        %v1232 = vrot.slane %v658, 2
        %v1233 = vrot.slane %v662, 2
        %v1234 = vrot.slane %v668, 2
        %v1235 = vrot.slane %v672, 2
        %v1236 = vrot.slane %v678, 2
        %v1237 = vrot.slane %v682, 2
        %v1238 = vrot.slane %v688, 2
        %v1239 = vrot.slane %v692, 2
        %v1240 = vrot.slane %v698, 2
        %v1241 = vrot.slane %v702, 2
        %v1242 = vrot.slane %v708, 2
        %v1243 = vrot.slane %v712, 2
        %v1244 = vrot.slane %v718, 2
        %v1245 = vrot.slane %v722, 2
        %vm1246 = vcmp.lt.s32.totalorder %v1179, 6
        %v1247 = vsel %vm1246, %v1244, %v1245
        %v1248 = vsel %vm1246, %v1243, %v1244
        %v1249 = vsel %vm1246, %v1242, %v1243
        %v1250 = vsel %vm1246, %v1241, %v1242
        %v1251 = vsel %vm1246, %v1240, %v1241
        %v1252 = vsel %vm1246, %v1239, %v1240
        %v1253 = vsel %vm1246, %v1238, %v1239
        %v1254 = vsel %vm1246, %v1237, %v1238
        %v1255 = vsel %vm1246, %v1236, %v1237
        %v1256 = vsel %vm1246, %v1235, %v1236
        %v1257 = vsel %vm1246, %v1234, %v1235
        %v1258 = vsel %vm1246, %v1233, %v1234
        %v1259 = vsel %vm1246, %v1232, %v1233
        %v1260 = vsel %vm1246, %v1231, %v1232
        %v1261 = vsel %vm1246, %v1230, %v1231
        %v1262 = vsel %vm1246, %v1245, %v1230
        %v1263 = vadd.f32 %v1214, %v1261
        %v1264 = vadd.f32 %v1215, %v1260
        %v1265 = vadd.f32 %v1216, %v1259
        %v1266 = vadd.f32 %v1217, %v1258
        %v1267 = vadd.f32 %v1218, %v1257
        %v1268 = vadd.f32 %v1219, %v1256
        %v1269 = vadd.f32 %v1220, %v1255
        %v1270 = vadd.f32 %v1221, %v1254
        %v1271 = vadd.f32 %v1222, %v1253
        %v1272 = vadd.f32 %v1223, %v1252
        %v1273 = vadd.f32 %v1224, %v1251
        %v1274 = vadd.f32 %v1225, %v1250
        %v1275 = vadd.f32 %v1226, %v1249
        %v1276 = vadd.f32 %v1227, %v1248
        %v1277 = vadd.f32 %v1228, %v1247
        %v1278 = vadd.f32 %v1229, %v1262
        %vm1279 = vcmp.lt.s32.totalorder %v1179, 14
        %vm1280 = vcmp.lt.s32.totalorder %v1180, 14
        %v1281 = vsel %vm1279, %v1263, -1e+30
        %v1282 = vsel %vm1280, %v1264, -1e+30
        %v1283 = vsel %vm1279, %v1265, -1e+30
        %v1284 = vsel %vm1280, %v1266, -1e+30
        %v1285 = vsel %vm1279, %v1267, -1e+30
        %v1286 = vsel %vm1280, %v1268, -1e+30
        %v1287 = vsel %vm1279, %v1269, -1e+30
        %v1288 = vsel %vm1280, %v1270, -1e+30
        %v1289 = vsel %vm1279, %v1271, -1e+30
        %v1290 = vsel %vm1280, %v1272, -1e+30
        %v1291 = vsel %vm1279, %v1273, -1e+30
        %v1292 = vsel %vm1280, %v1274, -1e+30
        %v1293 = vsel %vm1279, %v1275, -1e+30
        %v1294 = vsel %vm1280, %v1276, -1e+30
        %v1295 = vsel %vm1279, %v1277, -1e+30
        %v1296 = vsel %vm1280, %v1278, -1e+30
        %v1297 = vmax.f32 %v1281, %v1282
        %v1298 = vrot.slane %v1297, 4
        %v1299 = vmax.f32 %v1297, %v1298
        %v1300 = vrot.slane %v1299, 2
        %v1301 = vmax.f32 %v1299, %v1300
        %v1302 = vrot.slane %v1301, 1
        %v1303 = vmax.f32 %v1301, %v1302
        %v1304 = vmax.f32 %v1283, %v1284
        %v1305 = vrot.slane %v1304, 4
        %v1306 = vmax.f32 %v1304, %v1305
        %v1307 = vrot.slane %v1306, 2
        %v1308 = vmax.f32 %v1306, %v1307
        %v1309 = vrot.slane %v1308, 1
        %v1310 = vmax.f32 %v1308, %v1309
        %v1311 = vmax.f32 %v1285, %v1286
        %v1312 = vrot.slane %v1311, 4
        %v1313 = vmax.f32 %v1311, %v1312
        %v1314 = vrot.slane %v1313, 2
        %v1315 = vmax.f32 %v1313, %v1314
        %v1316 = vrot.slane %v1315, 1
        %v1317 = vmax.f32 %v1315, %v1316
        %v1318 = vmax.f32 %v1287, %v1288
        %v1319 = vrot.slane %v1318, 4
        %v1320 = vmax.f32 %v1318, %v1319
        %v1321 = vrot.slane %v1320, 2
        %v1322 = vmax.f32 %v1320, %v1321
        %v1323 = vrot.slane %v1322, 1
        %v1324 = vmax.f32 %v1322, %v1323
        %v1325 = vmax.f32 %v1289, %v1290
        %v1326 = vrot.slane %v1325, 4
        %v1327 = vmax.f32 %v1325, %v1326
        %v1328 = vrot.slane %v1327, 2
        %v1329 = vmax.f32 %v1327, %v1328
        %v1330 = vrot.slane %v1329, 1
        %v1331 = vmax.f32 %v1329, %v1330
        %v1332 = vmax.f32 %v1291, %v1292
        %v1333 = vrot.slane %v1332, 4
        %v1334 = vmax.f32 %v1332, %v1333
        %v1335 = vrot.slane %v1334, 2
        %v1336 = vmax.f32 %v1334, %v1335
        %v1337 = vrot.slane %v1336, 1
        %v1338 = vmax.f32 %v1336, %v1337
        %v1339 = vmax.f32 %v1293, %v1294
        %v1340 = vrot.slane %v1339, 4
        %v1341 = vmax.f32 %v1339, %v1340
        %v1342 = vrot.slane %v1341, 2
        %v1343 = vmax.f32 %v1341, %v1342
        %v1344 = vrot.slane %v1343, 1
        %v1345 = vmax.f32 %v1343, %v1344
        %v1346 = vmax.f32 %v1295, %v1296
        %v1347 = vrot.slane %v1346, 4
        %v1348 = vmax.f32 %v1346, %v1347
        %v1349 = vrot.slane %v1348, 2
        %v1350 = vmax.f32 %v1348, %v1349
        %v1351 = vrot.slane %v1350, 1
        %v1352 = vmax.f32 %v1350, %v1351
        %v1353 = vrot.slane %v761, 1
        %v1354 = vrot.slane %v765, 1
        %v1355 = vrot.slane %v771, 1
        %v1356 = vrot.slane %v775, 1
        %v1357 = vrot.slane %v781, 1
        %v1358 = vrot.slane %v785, 1
        %v1359 = vrot.slane %v791, 1
        %v1360 = vrot.slane %v795, 1
        %v1361 = vrot.slane %v801, 1
        %v1362 = vrot.slane %v805, 1
        %v1363 = vrot.slane %v811, 1
        %v1364 = vrot.slane %v815, 1
        %v1365 = vrot.slane %v821, 1
        %v1366 = vrot.slane %v825, 1
        %v1367 = vrot.slane %v831, 1
        %v1368 = vrot.slane %v835, 1
        %v1369 = vsel %vm1197, %v1367, %v1368
        %v1370 = vsel %vm1197, %v1366, %v1367
        %v1371 = vsel %vm1197, %v1365, %v1366
        %v1372 = vsel %vm1197, %v1364, %v1365
        %v1373 = vsel %vm1197, %v1363, %v1364
        %v1374 = vsel %vm1197, %v1362, %v1363
        %v1375 = vsel %vm1197, %v1361, %v1362
        %v1376 = vsel %vm1197, %v1360, %v1361
        %v1377 = vsel %vm1197, %v1359, %v1360
        %v1378 = vsel %vm1197, %v1358, %v1359
        %v1379 = vsel %vm1197, %v1357, %v1358
        %v1380 = vsel %vm1197, %v1356, %v1357
        %v1381 = vsel %vm1197, %v1355, %v1356
        %v1382 = vsel %vm1197, %v1354, %v1355
        %v1383 = vsel %vm1197, %v1353, %v1354
        %v1384 = vsel %vm1197, %v1368, %v1353
        %v1385 = vadd.f32 %v650, %v1383
        %v1386 = vadd.f32 %v654, %v1382
        %v1387 = vadd.f32 %v660, %v1381
        %v1388 = vadd.f32 %v664, %v1380
        %v1389 = vadd.f32 %v670, %v1379
        %v1390 = vadd.f32 %v674, %v1378
        %v1391 = vadd.f32 %v680, %v1377
        %v1392 = vadd.f32 %v684, %v1376
        %v1393 = vadd.f32 %v690, %v1375
        %v1394 = vadd.f32 %v694, %v1374
        %v1395 = vadd.f32 %v700, %v1373
        %v1396 = vadd.f32 %v704, %v1372
        %v1397 = vadd.f32 %v710, %v1371
        %v1398 = vadd.f32 %v714, %v1370
        %v1399 = vadd.f32 %v720, %v1369
        %v1400 = vadd.f32 %v724, %v1384
        %v1401 = vrot.slane %v763, 2
        %v1402 = vrot.slane %v767, 2
        %v1403 = vrot.slane %v773, 2
        %v1404 = vrot.slane %v777, 2
        %v1405 = vrot.slane %v783, 2
        %v1406 = vrot.slane %v787, 2
        %v1407 = vrot.slane %v793, 2
        %v1408 = vrot.slane %v797, 2
        %v1409 = vrot.slane %v803, 2
        %v1410 = vrot.slane %v807, 2
        %v1411 = vrot.slane %v813, 2
        %v1412 = vrot.slane %v817, 2
        %v1413 = vrot.slane %v823, 2
        %v1414 = vrot.slane %v827, 2
        %v1415 = vrot.slane %v833, 2
        %v1416 = vrot.slane %v837, 2
        %v1417 = vsel %vm1246, %v1415, %v1416
        %v1418 = vsel %vm1246, %v1414, %v1415
        %v1419 = vsel %vm1246, %v1413, %v1414
        %v1420 = vsel %vm1246, %v1412, %v1413
        %v1421 = vsel %vm1246, %v1411, %v1412
        %v1422 = vsel %vm1246, %v1410, %v1411
        %v1423 = vsel %vm1246, %v1409, %v1410
        %v1424 = vsel %vm1246, %v1408, %v1409
        %v1425 = vsel %vm1246, %v1407, %v1408
        %v1426 = vsel %vm1246, %v1406, %v1407
        %v1427 = vsel %vm1246, %v1405, %v1406
        %v1428 = vsel %vm1246, %v1404, %v1405
        %v1429 = vsel %vm1246, %v1403, %v1404
        %v1430 = vsel %vm1246, %v1402, %v1403
        %v1431 = vsel %vm1246, %v1401, %v1402
        %v1432 = vsel %vm1246, %v1416, %v1401
        %v1433 = vadd.f32 %v1385, %v1431
        %v1434 = vadd.f32 %v1386, %v1430
        %v1435 = vadd.f32 %v1387, %v1429
        %v1436 = vadd.f32 %v1388, %v1428
        %v1437 = vadd.f32 %v1389, %v1427
        %v1438 = vadd.f32 %v1390, %v1426
        %v1439 = vadd.f32 %v1391, %v1425
        %v1440 = vadd.f32 %v1392, %v1424
        %v1441 = vadd.f32 %v1393, %v1423
        %v1442 = vadd.f32 %v1394, %v1422
        %v1443 = vadd.f32 %v1395, %v1421
        %v1444 = vadd.f32 %v1396, %v1420
        %v1445 = vadd.f32 %v1397, %v1419
        %v1446 = vadd.f32 %v1398, %v1418
        %v1447 = vadd.f32 %v1399, %v1417
        %v1448 = vadd.f32 %v1400, %v1432
        %v1449 = vrot.slane %v874, 3
        %v1450 = vrot.slane %v878, 3
        %v1451 = vrot.slane %v884, 3
        %v1452 = vrot.slane %v888, 3
        %v1453 = vrot.slane %v894, 3
        %v1454 = vrot.slane %v898, 3
        %v1455 = vrot.slane %v904, 3
        %v1456 = vrot.slane %v908, 3
        %v1457 = vrot.slane %v914, 3
        %v1458 = vrot.slane %v918, 3
        %v1459 = vrot.slane %v924, 3
        %v1460 = vrot.slane %v928, 3
        %v1461 = vrot.slane %v934, 3
        %v1462 = vrot.slane %v938, 3
        %v1463 = vrot.slane %v944, 3
        %v1464 = vrot.slane %v948, 3
        %vm1465 = vcmp.lt.s32.totalorder %v1179, 5
        %v1466 = vsel %vm1465, %v1463, %v1464
        %v1467 = vsel %vm1465, %v1462, %v1463
        %v1468 = vsel %vm1465, %v1461, %v1462
        %v1469 = vsel %vm1465, %v1460, %v1461
        %v1470 = vsel %vm1465, %v1459, %v1460
        %v1471 = vsel %vm1465, %v1458, %v1459
        %v1472 = vsel %vm1465, %v1457, %v1458
        %v1473 = vsel %vm1465, %v1456, %v1457
        %v1474 = vsel %vm1465, %v1455, %v1456
        %v1475 = vsel %vm1465, %v1454, %v1455
        %v1476 = vsel %vm1465, %v1453, %v1454
        %v1477 = vsel %vm1465, %v1452, %v1453
        %v1478 = vsel %vm1465, %v1451, %v1452
        %v1479 = vsel %vm1465, %v1450, %v1451
        %v1480 = vsel %vm1465, %v1449, %v1450
        %v1481 = vsel %vm1465, %v1464, %v1449
        %v1482 = vadd.f32 %v1433, %v1480
        %v1483 = vadd.f32 %v1434, %v1479
        %v1484 = vadd.f32 %v1435, %v1478
        %v1485 = vadd.f32 %v1436, %v1477
        %v1486 = vadd.f32 %v1437, %v1476
        %v1487 = vadd.f32 %v1438, %v1475
        %v1488 = vadd.f32 %v1439, %v1474
        %v1489 = vadd.f32 %v1440, %v1473
        %v1490 = vadd.f32 %v1441, %v1472
        %v1491 = vadd.f32 %v1442, %v1471
        %v1492 = vadd.f32 %v1443, %v1470
        %v1493 = vadd.f32 %v1444, %v1469
        %v1494 = vadd.f32 %v1445, %v1468
        %v1495 = vadd.f32 %v1446, %v1467
        %v1496 = vadd.f32 %v1447, %v1466
        %v1497 = vadd.f32 %v1448, %v1481
        %vm1498 = vcmp.lt.s32.totalorder %v1179, 13
        %vm1499 = vcmp.lt.s32.totalorder %v1180, 13
        %v1500 = vsel %vm1498, %v1482, -1e+30
        %v1501 = vsel %vm1499, %v1483, -1e+30
        %v1502 = vsel %vm1498, %v1484, -1e+30
        %v1503 = vsel %vm1499, %v1485, -1e+30
        %v1504 = vsel %vm1498, %v1486, -1e+30
        %v1505 = vsel %vm1499, %v1487, -1e+30
        %v1506 = vsel %vm1498, %v1488, -1e+30
        %v1507 = vsel %vm1499, %v1489, -1e+30
        %v1508 = vsel %vm1498, %v1490, -1e+30
        %v1509 = vsel %vm1499, %v1491, -1e+30
        %v1510 = vsel %vm1498, %v1492, -1e+30
        %v1511 = vsel %vm1499, %v1493, -1e+30
        %v1512 = vsel %vm1498, %v1494, -1e+30
        %v1513 = vsel %vm1499, %v1495, -1e+30
        %v1514 = vsel %vm1498, %v1496, -1e+30
        %v1515 = vsel %vm1499, %v1497, -1e+30
        %v1516 = vmax.f32 %v1500, %v1501
        %v1517 = vrot.slane %v1516, 4
        %v1518 = vmax.f32 %v1516, %v1517
        %v1519 = vrot.slane %v1518, 2
        %v1520 = vmax.f32 %v1518, %v1519
        %v1521 = vrot.slane %v1520, 1
        %v1522 = vmax.f32 %v1520, %v1521
        %v1523 = vmax.f32 %v1502, %v1503
        %v1524 = vrot.slane %v1523, 4
        %v1525 = vmax.f32 %v1523, %v1524
        %v1526 = vrot.slane %v1525, 2
        %v1527 = vmax.f32 %v1525, %v1526
        %v1528 = vrot.slane %v1527, 1
        %v1529 = vmax.f32 %v1527, %v1528
        %v1530 = vmax.f32 %v1504, %v1505
        %v1531 = vrot.slane %v1530, 4
        %v1532 = vmax.f32 %v1530, %v1531
        %v1533 = vrot.slane %v1532, 2
        %v1534 = vmax.f32 %v1532, %v1533
        %v1535 = vrot.slane %v1534, 1
        %v1536 = vmax.f32 %v1534, %v1535
        %v1537 = vmax.f32 %v1506, %v1507
        %v1538 = vrot.slane %v1537, 4
        %v1539 = vmax.f32 %v1537, %v1538
        %v1540 = vrot.slane %v1539, 2
        %v1541 = vmax.f32 %v1539, %v1540
        %v1542 = vrot.slane %v1541, 1
        %v1543 = vmax.f32 %v1541, %v1542
        %v1544 = vmax.f32 %v1508, %v1509
        %v1545 = vrot.slane %v1544, 4
        %v1546 = vmax.f32 %v1544, %v1545
        %v1547 = vrot.slane %v1546, 2
        %v1548 = vmax.f32 %v1546, %v1547
        %v1549 = vrot.slane %v1548, 1
        %v1550 = vmax.f32 %v1548, %v1549
        %v1551 = vmax.f32 %v1510, %v1511
        %v1552 = vrot.slane %v1551, 4
        %v1553 = vmax.f32 %v1551, %v1552
        %v1554 = vrot.slane %v1553, 2
        %v1555 = vmax.f32 %v1553, %v1554
        %v1556 = vrot.slane %v1555, 1
        %v1557 = vmax.f32 %v1555, %v1556
        %v1558 = vmax.f32 %v1512, %v1513
        %v1559 = vrot.slane %v1558, 4
        %v1560 = vmax.f32 %v1558, %v1559
        %v1561 = vrot.slane %v1560, 2
        %v1562 = vmax.f32 %v1560, %v1561
        %v1563 = vrot.slane %v1562, 1
        %v1564 = vmax.f32 %v1562, %v1563
        %v1565 = vmax.f32 %v1514, %v1515
        %v1566 = vrot.slane %v1565, 4
        %v1567 = vmax.f32 %v1565, %v1566
        %v1568 = vrot.slane %v1567, 2
        %v1569 = vmax.f32 %v1567, %v1568
        %v1570 = vrot.slane %v1569, 1
        %v1571 = vmax.f32 %v1569, %v1570
        %v1572 = vrot.slane %v987, 1
        %v1573 = vrot.slane %v991, 1
        %v1574 = vrot.slane %v997, 1
        %v1575 = vrot.slane %v1001, 1
        %v1576 = vrot.slane %v1007, 1
        %v1577 = vrot.slane %v1011, 1
        %v1578 = vrot.slane %v1017, 1
        %v1579 = vrot.slane %v1021, 1
        %v1580 = vrot.slane %v1027, 1
        %v1581 = vrot.slane %v1031, 1
        %v1582 = vrot.slane %v1037, 1
        %v1583 = vrot.slane %v1041, 1
        %v1584 = vrot.slane %v1047, 1
        %v1585 = vrot.slane %v1051, 1
        %v1586 = vrot.slane %v1057, 1
        %v1587 = vrot.slane %v1061, 1
        %v1588 = vsel %vm1197, %v1586, %v1587
        %v1589 = vsel %vm1197, %v1585, %v1586
        %v1590 = vsel %vm1197, %v1584, %v1585
        %v1591 = vsel %vm1197, %v1583, %v1584
        %v1592 = vsel %vm1197, %v1582, %v1583
        %v1593 = vsel %vm1197, %v1581, %v1582
        %v1594 = vsel %vm1197, %v1580, %v1581
        %v1595 = vsel %vm1197, %v1579, %v1580
        %v1596 = vsel %vm1197, %v1578, %v1579
        %v1597 = vsel %vm1197, %v1577, %v1578
        %v1598 = vsel %vm1197, %v1576, %v1577
        %v1599 = vsel %vm1197, %v1575, %v1576
        %v1600 = vsel %vm1197, %v1574, %v1575
        %v1601 = vsel %vm1197, %v1573, %v1574
        %v1602 = vsel %vm1197, %v1572, %v1573
        %v1603 = vsel %vm1197, %v1587, %v1572
        %v1604 = vadd.f32 %v876, %v1602
        %v1605 = vadd.f32 %v880, %v1601
        %v1606 = vadd.f32 %v886, %v1600
        %v1607 = vadd.f32 %v890, %v1599
        %v1608 = vadd.f32 %v896, %v1598
        %v1609 = vadd.f32 %v900, %v1597
        %v1610 = vadd.f32 %v906, %v1596
        %v1611 = vadd.f32 %v910, %v1595
        %v1612 = vadd.f32 %v916, %v1594
        %v1613 = vadd.f32 %v920, %v1593
        %v1614 = vadd.f32 %v926, %v1592
        %v1615 = vadd.f32 %v930, %v1591
        %v1616 = vadd.f32 %v936, %v1590
        %v1617 = vadd.f32 %v940, %v1589
        %v1618 = vadd.f32 %v946, %v1588
        %v1619 = vadd.f32 %v950, %v1603
        %v1620 = vrot.slane %v989, 2
        %v1621 = vrot.slane %v993, 2
        %v1622 = vrot.slane %v999, 2
        %v1623 = vrot.slane %v1003, 2
        %v1624 = vrot.slane %v1009, 2
        %v1625 = vrot.slane %v1013, 2
        %v1626 = vrot.slane %v1019, 2
        %v1627 = vrot.slane %v1023, 2
        %v1628 = vrot.slane %v1029, 2
        %v1629 = vrot.slane %v1033, 2
        %v1630 = vrot.slane %v1039, 2
        %v1631 = vrot.slane %v1043, 2
        %v1632 = vrot.slane %v1049, 2
        %v1633 = vrot.slane %v1053, 2
        %v1634 = vrot.slane %v1059, 2
        %v1635 = vrot.slane %v1063, 2
        %v1636 = vsel %vm1246, %v1634, %v1635
        %v1637 = vsel %vm1246, %v1633, %v1634
        %v1638 = vsel %vm1246, %v1632, %v1633
        %v1639 = vsel %vm1246, %v1631, %v1632
        %v1640 = vsel %vm1246, %v1630, %v1631
        %v1641 = vsel %vm1246, %v1629, %v1630
        %v1642 = vsel %vm1246, %v1628, %v1629
        %v1643 = vsel %vm1246, %v1627, %v1628
        %v1644 = vsel %vm1246, %v1626, %v1627
        %v1645 = vsel %vm1246, %v1625, %v1626
        %v1646 = vsel %vm1246, %v1624, %v1625
        %v1647 = vsel %vm1246, %v1623, %v1624
        %v1648 = vsel %vm1246, %v1622, %v1623
        %v1649 = vsel %vm1246, %v1621, %v1622
        %v1650 = vsel %vm1246, %v1620, %v1621
        %v1651 = vsel %vm1246, %v1635, %v1620
        %v1652 = vadd.f32 %v1604, %v1650
        %v1653 = vadd.f32 %v1605, %v1649
        %v1654 = vadd.f32 %v1606, %v1648
        %v1655 = vadd.f32 %v1607, %v1647
        %v1656 = vadd.f32 %v1608, %v1646
        %v1657 = vadd.f32 %v1609, %v1645
        %v1658 = vadd.f32 %v1610, %v1644
        %v1659 = vadd.f32 %v1611, %v1643
        %v1660 = vadd.f32 %v1612, %v1642
        %v1661 = vadd.f32 %v1613, %v1641
        %v1662 = vadd.f32 %v1614, %v1640
        %v1663 = vadd.f32 %v1615, %v1639
        %v1664 = vadd.f32 %v1616, %v1638
        %v1665 = vadd.f32 %v1617, %v1637
        %v1666 = vadd.f32 %v1618, %v1636
        %v1667 = vadd.f32 %v1619, %v1651
        %v1668 = vrot.slane %v1100, 3
        %v1669 = vrot.slane %v1104, 3
        %v1670 = vrot.slane %v1110, 3
        %v1671 = vrot.slane %v1114, 3
        %v1672 = vrot.slane %v1120, 3
        %v1673 = vrot.slane %v1124, 3
        %v1674 = vrot.slane %v1130, 3
        %v1675 = vrot.slane %v1134, 3
        %v1676 = vrot.slane %v1140, 3
        %v1677 = vrot.slane %v1144, 3
        %v1678 = vrot.slane %v1150, 3
        %v1679 = vrot.slane %v1154, 3
        %v1680 = vrot.slane %v1160, 3
        %v1681 = vrot.slane %v1164, 3
        %v1682 = vrot.slane %v1170, 3
        %v1683 = vrot.slane %v1174, 3
        %v1684 = vsel %vm1465, %v1682, %v1683
        %v1685 = vsel %vm1465, %v1681, %v1682
        %v1686 = vsel %vm1465, %v1680, %v1681
        %v1687 = vsel %vm1465, %v1679, %v1680
        %v1688 = vsel %vm1465, %v1678, %v1679
        %v1689 = vsel %vm1465, %v1677, %v1678
        %v1690 = vsel %vm1465, %v1676, %v1677
        %v1691 = vsel %vm1465, %v1675, %v1676
        %v1692 = vsel %vm1465, %v1674, %v1675
        %v1693 = vsel %vm1465, %v1673, %v1674
        %v1694 = vsel %vm1465, %v1672, %v1673
        %v1695 = vsel %vm1465, %v1671, %v1672
        %v1696 = vsel %vm1465, %v1670, %v1671
        %v1697 = vsel %vm1465, %v1669, %v1670
        %v1698 = vsel %vm1465, %v1668, %v1669
        %v1699 = vsel %vm1465, %v1683, %v1668
        %v1700 = vadd.f32 %v1652, %v1698
        %v1701 = vadd.f32 %v1653, %v1697
        %v1702 = vadd.f32 %v1654, %v1696
        %v1703 = vadd.f32 %v1655, %v1695
        %v1704 = vadd.f32 %v1656, %v1694
        %v1705 = vadd.f32 %v1657, %v1693
        %v1706 = vadd.f32 %v1658, %v1692
        %v1707 = vadd.f32 %v1659, %v1691
        %v1708 = vadd.f32 %v1660, %v1690
        %v1709 = vadd.f32 %v1661, %v1689
        %v1710 = vadd.f32 %v1662, %v1688
        %v1711 = vadd.f32 %v1663, %v1687
        %v1712 = vadd.f32 %v1664, %v1686
        %v1713 = vadd.f32 %v1665, %v1685
        %v1714 = vadd.f32 %v1666, %v1684
        %v1715 = vadd.f32 %v1667, %v1699
        %v1716 = vrot.slane %v1102, 4
        %v1717 = vrot.slane %v1106, 4
        %v1718 = vrot.slane %v1112, 4
        %v1719 = vrot.slane %v1116, 4
        %v1720 = vrot.slane %v1122, 4
        %v1721 = vrot.slane %v1126, 4
        %v1722 = vrot.slane %v1132, 4
        %v1723 = vrot.slane %v1136, 4
        %v1724 = vrot.slane %v1142, 4
        %v1725 = vrot.slane %v1146, 4
        %v1726 = vrot.slane %v1152, 4
        %v1727 = vrot.slane %v1156, 4
        %v1728 = vrot.slane %v1162, 4
        %v1729 = vrot.slane %v1166, 4
        %v1730 = vrot.slane %v1172, 4
        %v1731 = vrot.slane %v1176, 4
        %vm1732 = vcmp.lt.s32.totalorder %v1179, 4
        %v1733 = vsel %vm1732, %v1730, %v1731
        %v1734 = vsel %vm1732, %v1729, %v1730
        %v1735 = vsel %vm1732, %v1728, %v1729
        %v1736 = vsel %vm1732, %v1727, %v1728
        %v1737 = vsel %vm1732, %v1726, %v1727
        %v1738 = vsel %vm1732, %v1725, %v1726
        %v1739 = vsel %vm1732, %v1724, %v1725
        %v1740 = vsel %vm1732, %v1723, %v1724
        %v1741 = vsel %vm1732, %v1722, %v1723
        %v1742 = vsel %vm1732, %v1721, %v1722
        %v1743 = vsel %vm1732, %v1720, %v1721
        %v1744 = vsel %vm1732, %v1719, %v1720
        %v1745 = vsel %vm1732, %v1718, %v1719
        %v1746 = vsel %vm1732, %v1717, %v1718
        %v1747 = vsel %vm1732, %v1716, %v1717
        %v1748 = vsel %vm1732, %v1731, %v1716
        %v1749 = vadd.f32 %v1700, %v1747
        %v1750 = vadd.f32 %v1701, %v1746
        %v1751 = vadd.f32 %v1702, %v1745
        %v1752 = vadd.f32 %v1703, %v1744
        %v1753 = vadd.f32 %v1704, %v1743
        %v1754 = vadd.f32 %v1705, %v1742
        %v1755 = vadd.f32 %v1706, %v1741
        %v1756 = vadd.f32 %v1707, %v1740
        %v1757 = vadd.f32 %v1708, %v1739
        %v1758 = vadd.f32 %v1709, %v1738
        %v1759 = vadd.f32 %v1710, %v1737
        %v1760 = vadd.f32 %v1711, %v1736
        %v1761 = vadd.f32 %v1712, %v1735
        %v1762 = vadd.f32 %v1713, %v1734
        %v1763 = vadd.f32 %v1714, %v1733
        %v1764 = vadd.f32 %v1715, %v1748
        %vm1765 = vcmp.lt.s32.totalorder %v1179, 12
        %vm1766 = vcmp.lt.s32.totalorder %v1180, 12
        %v1767 = vsel %vm1765, %v1749, -1e+30
        %v1768 = vsel %vm1766, %v1750, -1e+30
        %v1769 = vsel %vm1765, %v1751, -1e+30
        %v1770 = vsel %vm1766, %v1752, -1e+30
        %v1771 = vsel %vm1765, %v1753, -1e+30
        %v1772 = vsel %vm1766, %v1754, -1e+30
        %v1773 = vsel %vm1765, %v1755, -1e+30
        %v1774 = vsel %vm1766, %v1756, -1e+30
        %v1775 = vsel %vm1765, %v1757, -1e+30
        %v1776 = vsel %vm1766, %v1758, -1e+30
        %v1777 = vsel %vm1765, %v1759, -1e+30
        %v1778 = vsel %vm1766, %v1760, -1e+30
        %v1779 = vsel %vm1765, %v1761, -1e+30
        %v1780 = vsel %vm1766, %v1762, -1e+30
        %v1781 = vsel %vm1765, %v1763, -1e+30
        %v1782 = vsel %vm1766, %v1764, -1e+30
        %v1783 = vmax.f32 %v1767, %v1768
        %v1784 = vrot.slane %v1783, 4
        %v1785 = vmax.f32 %v1783, %v1784
        %v1786 = vrot.slane %v1785, 2
        %v1787 = vmax.f32 %v1785, %v1786
        %v1788 = vrot.slane %v1787, 1
        %v1789 = vmax.f32 %v1787, %v1788
        %v1790 = vmax.f32 %v1769, %v1770
        %v1791 = vrot.slane %v1790, 4
        %v1792 = vmax.f32 %v1790, %v1791
        %v1793 = vrot.slane %v1792, 2
        %v1794 = vmax.f32 %v1792, %v1793
        %v1795 = vrot.slane %v1794, 1
        %v1796 = vmax.f32 %v1794, %v1795
        %v1797 = vmax.f32 %v1771, %v1772
        %v1798 = vrot.slane %v1797, 4
        %v1799 = vmax.f32 %v1797, %v1798
        %v1800 = vrot.slane %v1799, 2
        %v1801 = vmax.f32 %v1799, %v1800
        %v1802 = vrot.slane %v1801, 1
        %v1803 = vmax.f32 %v1801, %v1802
        %v1804 = vmax.f32 %v1773, %v1774
        %v1805 = vrot.slane %v1804, 4
        %v1806 = vmax.f32 %v1804, %v1805
        %v1807 = vrot.slane %v1806, 2
        %v1808 = vmax.f32 %v1806, %v1807
        %v1809 = vrot.slane %v1808, 1
        %v1810 = vmax.f32 %v1808, %v1809
        %v1811 = vmax.f32 %v1775, %v1776
        %v1812 = vrot.slane %v1811, 4
        %v1813 = vmax.f32 %v1811, %v1812
        %v1814 = vrot.slane %v1813, 2
        %v1815 = vmax.f32 %v1813, %v1814
        %v1816 = vrot.slane %v1815, 1
        %v1817 = vmax.f32 %v1815, %v1816
        %v1818 = vmax.f32 %v1777, %v1778
        %v1819 = vrot.slane %v1818, 4
        %v1820 = vmax.f32 %v1818, %v1819
        %v1821 = vrot.slane %v1820, 2
        %v1822 = vmax.f32 %v1820, %v1821
        %v1823 = vrot.slane %v1822, 1
        %v1824 = vmax.f32 %v1822, %v1823
        %v1825 = vmax.f32 %v1779, %v1780
        %v1826 = vrot.slane %v1825, 4
        %v1827 = vmax.f32 %v1825, %v1826
        %v1828 = vrot.slane %v1827, 2
        %v1829 = vmax.f32 %v1827, %v1828
        %v1830 = vrot.slane %v1829, 1
        %v1831 = vmax.f32 %v1829, %v1830
        %v1832 = vmax.f32 %v1781, %v1782
        %v1833 = vrot.slane %v1832, 4
        %v1834 = vmax.f32 %v1832, %v1833
        %v1835 = vrot.slane %v1834, 2
        %v1836 = vmax.f32 %v1834, %v1835
        %v1837 = vrot.slane %v1836, 1
        %v1838 = vmax.f32 %v1836, %v1837
        %vm1847 = vcmask 1041409
        %v1848 = vsel %vm1847, %v1310, %v1303
        %vm1849 = vcmask 1042434
        %v1850 = vsel %vm1849, %v1317, %v1848
        %vm1851 = vcmask 1043459
        %v1852 = vsel %vm1851, %v1324, %v1850
        %vm1853 = vcmask 1044484
        %v1854 = vsel %vm1853, %v1331, %v1852
        %vm1855 = vcmask 1045509
        %v1856 = vsel %vm1855, %v1338, %v1854
        %vm1857 = vcmask 1046534
        %v1858 = vsel %vm1857, %v1345, %v1856
        %vm1859 = vcmask 1047559
        %v1860 = vsel %vm1859, %v1352, %v1858
        %v1870 = vsel %vm1847, %v1529, %v1522
        %v1871 = vsel %vm1849, %v1536, %v1870
        %v1872 = vsel %vm1851, %v1543, %v1871
        %v1873 = vsel %vm1853, %v1550, %v1872
        %v1874 = vsel %vm1855, %v1557, %v1873
        %v1875 = vsel %vm1857, %v1564, %v1874
        %v1876 = vsel %vm1859, %v1571, %v1875
        %v1886 = vsel %vm1847, %v1796, %v1789
        %v1887 = vsel %vm1849, %v1803, %v1886
        %v1888 = vsel %vm1851, %v1810, %v1887
        %v1889 = vsel %vm1853, %v1817, %v1888
        %v1890 = vsel %vm1855, %v1824, %v1889
        %v1891 = vsel %vm1857, %v1831, %v1890
        %v1892 = vsel %vm1859, %v1838, %v1891
        %v1894 = vld [vmem:[%s2] sm:$0x7]
        %v1896 = vlaneseq
        %v1897 = vshrl.u32 %v1896, 7
        %v1898 = vsub.s32 0, %v1897
        %v1899 = vrot.slane %v1894, %v1898
        %v1900 = vlaneseq
        %v1901 = vshrl.u32 %v1900, 7
        %v1902 = vsub.s32 1, %v1901
        %v1903 = vrot.slane %v1894, %v1902
        %v1904 = vlaneseq
        %v1905 = vshrl.u32 %v1904, 7
        %v1906 = vsub.s32 2, %v1905
        %v1907 = vrot.slane %v1894, %v1906
        %v1911 = vadd.f32 %v1860, %v1899
        %v1912 = vadd.f32 %v1876, %v1903
        %v1913 = vadd.f32 %v1892, %v1907
        %v1914 = vmax.f32 %v1911, 0.0
        %v1915 = vmax.f32 %v1912, 0.0
        %v1916 = vmax.f32 %v1913, 0.0
        %v1917 = vpack.c.bf16 %v1914, %v1914
        %v1918 = vpack.c.bf16 %v1915, %v1915
        %v1919 = vpack.c.bf16 %v1916, %v1916
        %v1920 = vld [vmem:[#allocation7] sm:$0xf]
        %v1921 = vld [vmem:[#allocation7 + $0x4] sm:$0xf]
        %v1922 = vld [vmem:[#allocation7 + $0x8] sm:$0xf]
        %v1923 = vld [vmem:[#allocation7 + $0xc] sm:$0xf]
        %v1924 = vld [vmem:[#allocation7 + $0x10] sm:$0xf]
        %v1925 = vld [vmem:[#allocation7 + $0x14] sm:$0xf]
        %v1926 = vld [vmem:[#allocation7 + $0x18] sm:$0xf]
        %v1927 = vld [vmem:[#allocation7 + $0x1c] sm:$0xf]
        %v1928 = vld [vmem:[#allocation7 + $0x20] sm:$0xf]
        %v1929 = vld [vmem:[#allocation7 + $0x24] sm:$0xf]
        %v1930 = vld [vmem:[#allocation7 + $0x28] sm:$0xf]
        %v1931 = vld [vmem:[#allocation7 + $0x2c] sm:$0xf]
        %v1932 = vld [vmem:[#allocation7 + $0x30] sm:$0xf]
        %v1933 = vld [vmem:[#allocation7 + $0x34] sm:$0xf]
        %v1934 = vld [vmem:[#allocation7 + $0x38] sm:$0xf]
        %v1935 = vld [vmem:[#allocation7 + $0x3c] sm:$0xf]
        %v1936 = vld [vmem:[#allocation7 + $0x40] sm:$0xf]
        %v1937 = vld [vmem:[#allocation7 + $0x44] sm:$0xf]
        %v1938 = vld [vmem:[#allocation7 + $0x48] sm:$0xf]
        %v1939 = vld [vmem:[#allocation7 + $0x4c] sm:$0xf]
        %v1940 = vld [vmem:[#allocation7 + $0x50] sm:$0xf]
        %v1941 = vld [vmem:[#allocation7 + $0x54] sm:$0xf]
        %v1942 = vld [vmem:[#allocation7 + $0x58] sm:$0xf]
        %v1943 = vld [vmem:[#allocation7 + $0x5c] sm:$0xf]
        %v1944 = vld [vmem:[#allocation7 + $0x60] sm:$0xf]
        %v1945 = vld [vmem:[#allocation7 + $0x64] sm:$0xf]
        %v1946 = vld [vmem:[#allocation7 + $0x68] sm:$0xf]
        %v1947 = vld [vmem:[#allocation7 + $0x6c] sm:$0xf]
        %v1948 = vld [vmem:[#allocation7 + $0x70] sm:$0xf]
        %v1949 = vld [vmem:[#allocation7 + $0x74] sm:$0xf]
        %v1950 = vld [vmem:[#allocation7 + $0x78] sm:$0xf]
        %v1951 = vld [vmem:[#allocation7 + $0x7c] sm:$0xf]
        %v1952 = vld [vmem:[#allocation7 + $0x80] sm:$0xf]
        %v1953 = vld [vmem:[#allocation7 + $0x84] sm:$0xf]
        %v1954 = vld [vmem:[#allocation7 + $0x88] sm:$0xf]
        %v1955 = vld [vmem:[#allocation7 + $0x8c] sm:$0xf]
        %v1956 = vld [vmem:[#allocation7 + $0x90] sm:$0xf]
        %v1957 = vld [vmem:[#allocation7 + $0x94] sm:$0xf]
        %v1958 = vld [vmem:[#allocation7 + $0x98] sm:$0xf]
        %v1959 = vld [vmem:[#allocation7 + $0x9c] sm:$0xf]
        %v1960 = vld [vmem:[#allocation7 + $0xa0] sm:$0xf]
        %v1961 = vld [vmem:[#allocation7 + $0xa4] sm:$0xf]
        %v1962 = vld [vmem:[#allocation7 + $0xa8] sm:$0xf]
        %v1963 = vld [vmem:[#allocation7 + $0xac] sm:$0xf]
        %v1964 = vld [vmem:[#allocation7 + $0xb0] sm:$0xf]
        %v1965 = vld [vmem:[#allocation7 + $0xb4] sm:$0xf]
        %v1966 = vld [vmem:[#allocation7 + $0xb8] sm:$0xf]
        %v1967 = vld [vmem:[#allocation7 + $0xbc] sm:$0xf]
        %v1968 = vld [vmem:[%s4] sm:$0x1]
        %v1970 = vlaneseq
        %v1971 = vshrl.u32 %v1970, 7
        %v1972 = vsub.s32 0, %v1971
        %v1973 = vrot.slane %v1968, %v1972
        %v2023 = vunpack.c.l.b16 %v1920
        %v2024 = vunpack.c.l.b16 %v1921
        %v2025 = vunpack.c.l.b16 %v1922
        %v2026 = vunpack.c.l.b16 %v1923
        %v2027 = vunpack.c.l.b16 %v1924
        %v2028 = vunpack.c.l.b16 %v1925
        %v2029 = vunpack.c.l.b16 %v1926
        %v2030 = vunpack.c.l.b16 %v1927
        %v2031 = vunpack.c.l.b16 %v1928
        %v2032 = vunpack.c.l.b16 %v1929
        %v2033 = vunpack.c.l.b16 %v1930
        %v2034 = vunpack.c.l.b16 %v1931
        %v2035 = vunpack.c.l.b16 %v1932
        %v2036 = vunpack.c.l.b16 %v1933
        %v2037 = vunpack.c.l.b16 %v1934
        %v2038 = vunpack.c.l.b16 %v1935
        %v2039 = vunpack.c.l.b16 %v1936
        %v2040 = vunpack.c.l.b16 %v1937
        %v2041 = vunpack.c.l.b16 %v1938
        %v2042 = vunpack.c.l.b16 %v1939
        %v2043 = vunpack.c.l.b16 %v1940
        %v2044 = vunpack.c.l.b16 %v1941
        %v2045 = vunpack.c.l.b16 %v1942
        %v2046 = vunpack.c.l.b16 %v1943
        %v2047 = vunpack.c.l.b16 %v1944
        %v2048 = vunpack.c.l.b16 %v1945
        %v2049 = vunpack.c.l.b16 %v1946
        %v2050 = vunpack.c.l.b16 %v1947
        %v2051 = vunpack.c.l.b16 %v1948
        %v2052 = vunpack.c.l.b16 %v1949
        %v2053 = vunpack.c.l.b16 %v1950
        %v2054 = vunpack.c.l.b16 %v1951
        %v2055 = vunpack.c.l.b16 %v1952
        %v2056 = vunpack.c.l.b16 %v1953
        %v2057 = vunpack.c.l.b16 %v1954
        %v2058 = vunpack.c.l.b16 %v1955
        %v2059 = vunpack.c.l.b16 %v1956
        %v2060 = vunpack.c.l.b16 %v1957
        %v2061 = vunpack.c.l.b16 %v1958
        %v2062 = vunpack.c.l.b16 %v1959
        %v2063 = vunpack.c.l.b16 %v1960
        %v2064 = vunpack.c.l.b16 %v1961
        %v2065 = vunpack.c.l.b16 %v1962
        %v2066 = vunpack.c.l.b16 %v1963
        %v2067 = vunpack.c.l.b16 %v1964
        %v2068 = vunpack.c.l.b16 %v1965
        %v2069 = vunpack.c.l.b16 %v1966
        %v2070 = vunpack.c.l.b16 %v1967
        %v2071 = vpack.c.b16 %v2024, %v2023
        %v2072 = vpack.c.b16 %v2026, %v2025
        %v2073 = vpack.c.b16 %v2028, %v2027
        %v2074 = vpack.c.b16 %v2030, %v2029
        %v2075 = vpack.c.b16 %v2032, %v2031
        %v2076 = vpack.c.b16 %v2034, %v2033
        %v2077 = vpack.c.b16 %v2036, %v2035
        %v2078 = vpack.c.b16 %v2038, %v2037
        %v2079 = vpack.c.b16 %v2040, %v2039
        %v2080 = vpack.c.b16 %v2042, %v2041
        %v2081 = vpack.c.b16 %v2044, %v2043
        %v2082 = vpack.c.b16 %v2046, %v2045
        %v2083 = vpack.c.b16 %v2048, %v2047
        %v2084 = vpack.c.b16 %v2050, %v2049
        %v2085 = vpack.c.b16 %v2052, %v2051
        %v2086 = vpack.c.b16 %v2054, %v2053
        %v2087 = vpack.c.b16 %v2056, %v2055
        %v2088 = vpack.c.b16 %v2058, %v2057
        %v2089 = vpack.c.b16 %v2060, %v2059
        %v2090 = vpack.c.b16 %v2062, %v2061
        %v2091 = vpack.c.b16 %v2064, %v2063
        %v2092 = vpack.c.b16 %v2066, %v2065
        %v2093 = vpack.c.b16 %v2068, %v2067
        %v2094 = vpack.c.b16 %v2070, %v2069
        %2119 = vmatprep.subr.bf16.mxu0 0
        %2120 = vmatpush1.bf16.msra.mxu0 %v2071
        %2121 = vmatprep.subr.bf16.mxu0 0
        %2122 = vmatpush1.bf16.msra.mxu0 %v2072
        %2123 = vmatprep.subr.bf16.mxu0 0
        %2124 = vmatpush1.bf16.msra.mxu0 %v2073
        %2125 = vmatprep.subr.bf16.mxu0 0
        %2126 = vmatpush1.bf16.msra.mxu0 %v2074
        %2127 = vmatprep.subr.bf16.mxu0 0
        %2128 = vmatpush1.bf16.msra.mxu0 %v2075
        %2129 = vmatprep.subr.bf16.mxu0 0
        %2130 = vmatpush1.bf16.msra.mxu0 %v2076
        %2131 = vmatprep.subr.bf16.mxu0 0
        %2132 = vmatpush1.bf16.msra.mxu0 %v2077
        %2133 = vmatprep.subr.bf16.mxu0 0
        %2134 = vmatpush1.bf16.msra.mxu0 %v2078
        %2135 = vmatprep.subr.bf16.mxu0 0
        %2136 = vmatpush1.bf16.msra.mxu0 %v2079
        %2137 = vmatprep.subr.bf16.mxu0 0
        %2138 = vmatpush1.bf16.msra.mxu0 %v2080
        %2139 = vmatprep.subr.bf16.mxu0 0
        %2140 = vmatpush1.bf16.msra.mxu0 %v2081
        %2141 = vmatprep.subr.bf16.mxu0 0
        %2142 = vmatpush1.bf16.msra.mxu0 %v2082
        %2143 = vmatprep.subr.bf16.mxu0 0
        %2144 = vmatpush1.bf16.msra.mxu0 %v2083
        %2145 = vmatprep.subr.bf16.mxu0 0
        %2146 = vmatpush1.bf16.msra.mxu0 %v2084
        %2147 = vmatprep.subr.bf16.mxu0 0
        %2148 = vmatpush1.bf16.msra.mxu0 %v2085
        %2149 = vmatprep.subr.bf16.mxu0 0
        %2150 = vmatpush1.bf16.msra.mxu0 %v2086
        %2151 = vmatprep.mubr.bf16.mxu0 %v1918
        %2152 = vmatmul.mubr.bf16.gmra.mrb[0].mxu0 %v1917
        %v2153 = vpop.f32.mrb[0].mxu0
        %v2154 = vadd.f32 %v1973, %v2153
        %v2155 = vpop.f32.mrb[0].mxu0
        %v2156 = vpop.f32.mrb[0].mxu0
        %v2157 = vpop.f32.mrb[0].mxu0
        %2158 = vdwg.mxu0
        %2159 = vmatprep.subr.bf16.mxu0 0
        %2160 = vmatpush1.bf16.msra.mxu0 %v2087
        %2161 = vmatprep.subr.bf16.mxu0 0
        %2162 = vmatpush1.bf16.msra.mxu0 %v2088
        %2163 = vmatprep.subr.bf16.mxu0 0
        %2164 = vmatpush1.bf16.msra.mxu0 %v2089
        %2165 = vmatprep.subr.bf16.mxu0 0
        %2166 = vmatpush1.bf16.msra.mxu0 %v2090
        %2167 = vmatprep.subr.bf16.mxu0 0
        %2168 = vmatpush1.bf16.msra.mxu0 %v2091
        %2169 = vmatprep.subr.bf16.mxu0 0
        %2170 = vmatpush1.bf16.msra.mxu0 %v2092
        %2171 = vmatprep.subr.bf16.mxu0 0
        %2172 = vmatpush1.bf16.msra.mxu0 %v2093
        %2173 = vmatprep.subr.bf16.mxu0 0
        %2174 = vmatpush1.bf16.msra.mxu0 %v2094
        %2175 = vmatprep.subr.bf16.mxu0 0
        %2176 = vmatpush1.bf16.msra.mxu0 0
        %2177 = vmatprep.subr.bf16.mxu0 0
        %2178 = vmatpush1.bf16.msra.mxu0 0
        %2179 = vmatprep.subr.bf16.mxu0 0
        %2180 = vmatpush1.bf16.msra.mxu0 0
        %2181 = vmatprep.subr.bf16.mxu0 0
        %2182 = vmatpush1.bf16.msra.mxu0 0
        %2183 = vmatprep.subr.bf16.mxu0 0
        %2184 = vmatpush1.bf16.msra.mxu0 0
        %2185 = vmatprep.subr.bf16.mxu0 0
        %2186 = vmatpush1.bf16.msra.mxu0 0
        %2187 = vmatprep.subr.bf16.mxu0 0
        %2188 = vmatpush1.bf16.msra.mxu0 0
        %2189 = vmatprep.subr.bf16.mxu0 0
        %2190 = vmatpush1.bf16.msra.mxu0 0
        %2191 = vmatprep.mubr.bf16.mxu0 0
        %2192 = vmatmul.mubr.bf16.gmra.mrb[0].mxu0 %v1919
        %v2193 = vpop.f32.mrb[0].mxu0
        %v2194 = vadd.f32 %v2154, %v2193
        %v2195 = vpop.f32.mrb[0].mxu0
        %v2196 = vpop.f32.mrb[0].mxu0
        %v2197 = vpop.f32.mrb[0].mxu0
        %2198 = vdwg.mxu0
        %2199 = vmax.xlane.f32.xlu0 %v2194
        %v2200 = vpop.xlane.xlu0 %2199
        %v2201 = vsub.f32 %v2194, %v2200
        %v2202 = vmul.f32 %v2201, 1.442695
        %v2203 = vpow.pop %v2202
        %2204 = vadd.xlane.f32.xlu0 %v2203
        %v2205 = vpop.xlane.xlu0 %2204
        %v2206 = vrcp.pop %v2205
        %v2207 = vmul.f32 %v2203, %v2206
        %2208 = vst [vmem:[%s272] sm:$0xff] %v2207
        %s2209 = sand.u32 %s141, 1
        %s2210 = scalar_lea.sflag [#allocation4], %s2209
        %s2211 = sand.u32 %s141, 1
        %s2212 = smul.addr %s2211, 8
        %s2213 = scalar_lea.vmem [#allocation8], %s2212
        // Predicated region
        $region53: #{tpu_custom_call.1} parent=39 // pred_check
          %p2214 = pneg %p151
        $region54: #{tpu_custom_call.1} parent=39 // pred_check_branch
          %2216 = sbr.rel (%p2214) target = $region56
        $region55: #{tpu_custom_call.1} parent=39 // pred_region
          %s2218 = ssub.s32 128, 128
          %2219 = vsyncadd %s2210, %s2218
          %s2220 = smul.addr %s23, 128
          %s2221 = scalar_lea.hbm %s5, %s2220
          %s2223 = sshll.u32 %s2213, 4
          %s2224 = int_to_ptr.vmem [resolvable:$true] %s2223
          %2226 = dma.vmem_to_hbm [thread:$0]  %s2224, 128, %s2221, %s2210
        $region56: #{tpu_custom_call.1} parent=39 // pred_fallthru
          _
      $region40: #{tpu_custom_call.1} parent=5 // pred_fallthru
        _
      %p2227 = scmp.le.s32.totalorder 2, %s18
      // Predicated region
      $region57: #{tpu_custom_call.1} parent=5 // pred_check
        %p2228 = pneg %p2227
      $region58: #{tpu_custom_call.1} parent=5 // pred_check_branch
        %2230 = sbr.rel (%p2228) target = $region60
      $region59: #{tpu_custom_call.1} parent=5 // pred_region
        %s2231 = ssub.s32 %s18, 2
        // Predicated region
        $region61: #{tpu_custom_call.1} parent=59 // pred_check
          %p2232 = pneg %p157
        $region62: #{tpu_custom_call.1} parent=59 // pred_check_branch
          %2234 = sbr.rel (%p2232) target = $region64
        $region63: #{tpu_custom_call.1} parent=59 // pred_region
          %s2235 = sand.u32 %s142, 1
          %s2236 = scalar_lea.sflag [#allocation4], %s2235
          %s2237 = sand.u32 %s142, 1
          %s2238 = smul.addr %s2237, 8
          %s2239 = scalar_lea.vmem [#allocation8], %s2238
          %2240 = dma.done %s2236, 128
        $region64: #{tpu_custom_call.1} parent=59 // pred_fallthru
          _
      $region60: #{tpu_custom_call.1} parent=5 // pred_fallthru
        _
    $region6: #{tpu_custom_call.1} parent=1 // loop_footer
      %s22 = sadd.s32 1, %s18
    $region7: #{tpu_custom_call.1} parent=1 // loop_footer_branch
      %17 = sbr.rel target = $region3
    $region8: #{tpu_custom_call.1} parent=1 // loop_exit
      _
    %2241 = vsyncpa [#allocation3], 1
    %s2242 = scalar_lea.sflag [#allocation3], 1
    %2243 = vsyncpa %s2242, 1
    %2244 = vsyncpa [#allocation6], 1
    %2245 = vsyncpa [#allocation4], 1
    %s2246 = scalar_lea.sflag [#allocation4], 1
    %2247 = vsyncpa %s2246, 1

</llo_original>
